<compile_context>
chip_gen: v7x
topology: tpu7x:2x2x1
jax: 0.10.0
libtpu: 0.0.40
codegen_flags: <defaults>
</compile_context>

<pallas_src>
import jax
import jax.numpy as jnp
from jax.experimental import pallas as pl
from jax.experimental.pallas import tpu as pltpu

K = 512          # feature dim, fixed by the PyTorch module
P_DROP = 0.2     # dropout probability (training-mode inverted dropout)


def layer_kernel(x_ref, w_ref, b_ref, m_ref, o_ref):
    """Fused  y = x @ W^T + b ; out = x + y * scaled_keep_mask  for one row tile."""
    x = x_ref[...]                                               # (tm, K) f32
    # ---- MXU matmul + bias ----
    y = jnp.dot(x, w_ref[...], preferred_element_type=jnp.float32)
    y = y + b_ref[...]                                           # bias broadcast (1, K)
    # ---- dropout (mask already holds 0 or 1/(1-p)) + residual add ----
    o_ref[...] = (x + y * m_ref[...].astype(jnp.float32)).astype(o_ref.dtype)


def make_dropout_mask(key, shape, p=P_DROP, dtype=jnp.bfloat16):
    """Pre-scaled inverted-dropout keep mask: 0 with prob p, 1/(1-p) with prob 1-p."""
    keep = jax.random.bernoulli(key, 1.0 - p, shape)
    return (keep.astype(jnp.float32) * (1.0 / (1.0 - p))).astype(dtype)


def layer_forward(x, weight, bias, keep_mask, *, tm=256):
    """
    x:         (M, K) f32
    weight:    (K, K) f32, torch layout (out_features, in_features)
    bias:      (K,)   f32
    keep_mask: (M, K) bf16, pre-scaled keep mask from make_dropout_mask
    tm:        row tile; keep it a multiple of 128 (MXU rows).  tm=256 uses
               ~4.5 MiB VMEM; stay <= ~1024 on v5e (16 MiB scoped default) and
               re-check against v7x's 64 MiB physical / 32 MiB scoped VMEM
               before growing further.
    """
    M, Kdim = x.shape
    assert Kdim == K
    w_t = weight.T                       # kernel computes x @ W^T
    b = bias.reshape(1, K)

    # Pad rows up to a multiple of the tile (sliced off at the end).
    n_blocks = pl.cdiv(M, tm)
    Mp = n_blocks * tm
    if Mp != M:
        pad = Mp - M
        x = jnp.pad(x, ((0, pad), (0, 0)))
        keep_mask = jnp.pad(keep_mask, ((0, pad), (0, 0)))

    out = pl.pallas_call(
        layer_kernel,
        out_shape=jax.ShapeDtypeStruct((Mp, K), jnp.float32),
        grid=(n_blocks,),
        in_specs=[
            pl.BlockSpec((tm, K), lambda i: (i, 0)),     # x row tile
            pl.BlockSpec((K, K), lambda i: (0, 0)),      # full weight (constant block)
            pl.BlockSpec((1, K), lambda i: (0, 0)),      # bias (constant block)
            pl.BlockSpec((tm, K), lambda i: (i, 0)),     # dropout mask row tile
        ],
        out_specs=pl.BlockSpec((tm, K), lambda i: (i, 0)),
        compiler_params=pltpu.CompilerParams(
            dimension_semantics=("parallel",),           # independent row tiles -> 2 TCs on v7x
        ),
    )(x, w_t, b, keep_mask)

    return out[:M] if Mp != M else out


if __name__ == "__main__":
    key = jax.random.PRNGKey(0)
    k_x, k_w, k_b, k_d = jax.random.split(key, 4)

    M = 512                                              # small batch of rows, K fixed at 512
    x = jax.random.normal(k_x, (M, K), dtype=jnp.float32)

    # Deterministic init matching torch.nn.Linear: U(-1/sqrt(K), 1/sqrt(K))
    bound = 1.0 / (K ** 0.5)
    weight = jax.random.uniform(k_w, (K, K), jnp.float32, -bound, bound)   # (out, in)
    bias = jax.random.uniform(k_b, (K,), jnp.float32, -bound, bound)

    mask = make_dropout_mask(k_d, (M, K))

    out = layer_forward(x, weight, bias, mask)
    jax.block_until_ready(out)

    assert out.shape == (M, K) and out.dtype == jnp.float32
    assert bool(jnp.all(jnp.isfinite(out)))

    # Reference (same mask -> deterministic comparison); loose tol for MXU f32 path.
    ref = x + (x @ weight.T + bias[None, :]) * mask.astype(jnp.float32)
    assert bool(jnp.allclose(out, ref, atol=5e-2, rtol=5e-2))

    print("KERNEL_OK")
</pallas_src>

<mosaic_0001>
module attributes {stable_mosaic.version = 11 : i64} {
  func.func @layer_kernel(%arg0: i32, %arg1: memref<256x512xf32, #tpu.memory_space<vmem>>, %arg2: memref<512x512xf32, #tpu.memory_space<vmem>>, %arg3: memref<1x512xf32, #tpu.memory_space<vmem>>, %arg4: memref<256x512xbf16, #tpu.memory_space<vmem>>, %arg5: memref<256x512xf32, #tpu.memory_space<vmem>>) attributes {dimension_semantics = [#tpu.dimension_semantics<parallel>], iteration_bounds = array<i64: 2>, scalar_prefetch = 0 : i64, scratch_operands = 0 : i64, tpu.core_type = #tpu.core_type<tc>, window_params = [{transform_indices = @transform_0, window_bounds = array<i64: 256, 512>}, {pipeline_mode = #tpu.pipeline_mode<synchronous>, transform_indices = @transform_1, window_bounds = array<i64: 512, 512>}, {pipeline_mode = #tpu.pipeline_mode<synchronous>, transform_indices = @transform_2, window_bounds = array<i64: 1, 512>}, {transform_indices = @transform_3, window_bounds = array<i64: 256, 512>}, {transform_indices = @transform_4, window_bounds = array<i64: 256, 512>}]} {
    %c0 = arith.constant 0 : index
    %c0_0 = arith.constant 0 : index
    %0 = vector.load %arg1[%c0, %c0_0] : memref<256x512xf32, #tpu.memory_space<vmem>>, vector<256x512xf32>
    %c0_1 = arith.constant 0 : index
    %c0_2 = arith.constant 0 : index
    %1 = vector.load %arg2[%c0_1, %c0_2] : memref<512x512xf32, #tpu.memory_space<vmem>>, vector<512x512xf32>
    %cst = arith.constant dense<0.000000e+00> : vector<256x512xf32>
    %2 = tpu.matmul %0, %1, %cst {dimension_numbers = #tpu.dot_dimension_numbers<[1], [0], [0], [1], [0, 0, 1, 1], [], []>} : vector<256x512xf32>, vector<512x512xf32>, vector<256x512xf32> -> vector<256x512xf32>
    %c0_3 = arith.constant 0 : index
    %c0_4 = arith.constant 0 : index
    %3 = vector.load %arg3[%c0_3, %c0_4] : memref<1x512xf32, #tpu.memory_space<vmem>>, vector<1x512xf32>
    %4 = vector.broadcast %3 : vector<1x512xf32> to vector<256x512xf32>
    %5 = arith.addf %2, %4 : vector<256x512xf32>
    %c0_5 = arith.constant 0 : index
    %c0_6 = arith.constant 0 : index
    %6 = vector.load %arg4[%c0_5, %c0_6] : memref<256x512xbf16, #tpu.memory_space<vmem>>, vector<256x512xbf16>
    %7 = arith.extf %6 : vector<256x512xbf16> to vector<256x512xf32>
    %8 = arith.mulf %5, %7 : vector<256x512xf32>
    %9 = arith.addf %0, %8 : vector<256x512xf32>
    %c0_7 = arith.constant 0 : index
    %c0_8 = arith.constant 0 : index
    %10 = vector.load %arg5[%c0_7, %c0_8] : memref<256x512xf32, #tpu.memory_space<vmem>>, vector<256x512xf32>
    tpu.vector_store %arg5[%c0_7, %c0_8], %9 {strides = array<i32>} : memref<256x512xf32, #tpu.memory_space<vmem>>, vector<256x512xf32>,
    return
  }
  func.func @transform_0(%arg0: i32) -> (i32, i32) {
    %c0_i32 = arith.constant 0 : i32
    %c0_i32_0 = arith.constant 0 : i32
    return %arg0, %c0_i32 : i32, i32
  }
  func.func @transform_1(%arg0: i32) -> (i32, i32) {
    %c0_i32 = arith.constant 0 : i32
    %c0_i32_0 = arith.constant 0 : i32
    %c0_i32_1 = arith.constant 0 : i32
    return %c0_i32, %c0_i32_0 : i32, i32
  }
  func.func @transform_2(%arg0: i32) -> (i32, i32) {
    %c0_i32 = arith.constant 0 : i32
    %c0_i32_0 = arith.constant 0 : i32
    %c0_i32_1 = arith.constant 0 : i32
    return %c0_i32, %c0_i32_0 : i32, i32
  }
  func.func @transform_3(%arg0: i32) -> (i32, i32) {
    %c0_i32 = arith.constant 0 : i32
    %c0_i32_0 = arith.constant 0 : i32
    return %arg0, %c0_i32 : i32, i32
  }
  func.func @transform_4(%arg0: i32) -> (i32, i32) {
    %c0_i32 = arith.constant 0 : i32
    %c0_i32_0 = arith.constant 0 : i32
    return %arg0, %c0_i32 : i32, i32
  }
}

</mosaic_0001>

<llo_original>
// kernel: tpu_custom_call.1
$region0: #{tpu_custom_call.1}
  #allocation0 [shape = 'u32[]', space=smem, size = 0x4, offset = 0x4, fixed_abs, tag = 'smem constant byte address 0x4 - core index']
  #allocation1 [shape = 'u32[144,128]{1,0:T(1,128)}', space=vmem, size = 0x12000, scoped, tag = 'internal scratch']
  %s0 = inlined_call_operand.hbm [shape: f32[512,512], index: 0, kind: input, shape index: {}]
  %s1 = inlined_call_operand.hbm [shape: f32[512,512], index: 1, kind: input, shape index: {}]
  %s2 = inlined_call_operand.vmem [shape: f32[1,512], index: 2, kind: input, shape index: {}]
  %s3 = inlined_call_operand.hbm [shape: bf16[512,512], index: 3, kind: input, shape index: {}]
  %s4 = inlined_call_operand.hbm [shape: f32[512,512], index: 4, kind: output, shape index: {}]
  %s5 = sld [smem:[#allocation0]]
  $region61: #{tpu_custom_call.1} parent=0
    _
  %s7 = ssub.s32 1, %s5
  %s8 = scalar_select 0, %s7, %s5
  $region1: #{tpu_custom_call.1} parent=0
    #allocation2 [shape = 'u8[1048576]{0}', space=vmem, size = 0x100000, scoped, tag = 'input window, operand 0']
    #allocation3 [shape = 's32[2]{0}', space=sflag, size = 0x8, scoped, tag = 'scoped memory for tpu_custom_call.1']
    #allocation4 [shape = 's32[2]{0}', space=sflag, size = 0x8, scoped, tag = 'scoped memory for tpu_custom_call.1']
    #allocation5 [shape = 'u8[1048576]{0}', space=vmem, size = 0x100000, scoped, tag = 'input window, operand 1, single buffered']
    #allocation6 [shape = 's32[1]{0}', space=sflag, size = 0x4, scoped, tag = 'scoped memory for tpu_custom_call.1']
    #allocation7 [shape = 'u8[524288]{0}', space=vmem, size = 0x80000, scoped, tag = 'input window, operand 3']
    #allocation8 [shape = 'u8[1048576]{0}', space=vmem, size = 0x100000, scoped, tag = 'output window, operand 0']
    %9 = vsyncpa [#allocation3], 0
    %s10 = scalar_lea.sflag [#allocation3], 1
    %11 = vsyncpa %s10, 0
    %12 = vsyncpa [#allocation6], 0
    %13 = vsyncpa [#allocation4], 0
    %s14 = scalar_lea.sflag [#allocation4], 1
    %15 = vsyncpa %s14, 0
    loop: start=0, step=1, limit=4
    $region2: #{tpu_custom_call.1} parent=1 // loop_pre_header
      _
    $region3: #{tpu_custom_call.1} parent=1 // loop_header
      %s17 = sphi 0, %s21
      %p18 = scmp.ge.s32.totalorder %s17, 4
      %s27 = sphi 0, %s29
      %s30 = sphi 0, %s27
      %s31 = sphi 0, %s30
      %s47 = sphi 0, %s31
      %s51 = sphi 0, %s51
      %s53 = sphi 0, %s51
      %s54 = sphi 0, %s53
      %s68 = sphi 0, %s54
      %s72 = sphi 0, %s72
      %s74 = sphi 0, %s72
      %s75 = sphi 0, %s74
      %s89 = sphi 0, %s75
      %s95 = sphi 0, %s97
      %s98 = sphi 0, %s95
      %s99 = sphi 0, %s98
      %s115 = sphi 0, %s99
      %s121 = sphi 0, %s123
      %s124 = sphi 0, %s121
      %s125 = sphi 0, %s124
      %s141 = sphi 0, %s125
    $region4: #{tpu_custom_call.1} parent=1 // loop_header_branch
      %20 = sbr.rel (%p18) target = $region8
    $region5: #{tpu_custom_call.1} parent=1 // loop_body
      %s22 = ssub.s32 %s17, 1
      %s23 = ssub.s32 %s17, 2
      %s24 = sadd.s32 %s17, 1
      %s25 = ssub.s32 %s17, %s24
      %p26 = scmp.eq.s32.totalorder %s25, 0
      %s28 = sadd.s32 %s27, 1
      %s29 = scalar_select %p26, %s27, %s28
      %p32 = pneg %p26
      %p33 = scmp.eq.s32.totalorder %s17, 1
      %p34 = por %p32, %p33
      %p35 = scmp.ne.s32.totalorder %s27, %s30
      %p36 = scmp.eq.s32.totalorder %s17, 0
      %p37 = por %p35, %p36
      %p38 = scmp.ne.s32.totalorder %s27, %s30
      %p39 = scmp.eq.s32.totalorder %s22, 1
      %p40 = por %p38, %p39
      %p41 = scmp.ne.s32.totalorder %s30, %s31
      %p42 = scmp.eq.s32.totalorder %s22, 0
      %p43 = por %p41, %p42
      %p44 = scmp.ne.s32.totalorder %s30, %s31
      %p45 = scmp.eq.s32.totalorder %s23, 1
      %p46 = por %p44, %p45
      %p48 = scmp.ne.s32.totalorder %s31, %s47
      %p49 = scmp.eq.s32.totalorder %s23, 0
      %p50 = por %p48, %p49
      %s52 = sadd.s32 %s51, 1
      %p55 = scmp.eq.s32.totalorder %s17, 1
      %p56 = scmp.ne.s32.totalorder %s51, %s53
      %p57 = scmp.eq.s32.totalorder %s17, 0
      %p58 = por %p56, %p57
      %p59 = scmp.ne.s32.totalorder %s51, %s53
      %p60 = scmp.eq.s32.totalorder %s22, 1
      %p61 = por %p59, %p60
      %p62 = scmp.ne.s32.totalorder %s53, %s54
      %p63 = scmp.eq.s32.totalorder %s22, 0
      %p64 = por %p62, %p63
      %p65 = scmp.ne.s32.totalorder %s53, %s54
      %p66 = scmp.eq.s32.totalorder %s23, 1
      %p67 = por %p65, %p66
      %p69 = scmp.ne.s32.totalorder %s54, %s68
      %p70 = scmp.eq.s32.totalorder %s23, 0
      %p71 = por %p69, %p70
      %s73 = sadd.s32 %s72, 1
      %p76 = scmp.eq.s32.totalorder %s17, 1
      %p77 = scmp.ne.s32.totalorder %s72, %s74
      %p78 = scmp.eq.s32.totalorder %s17, 0
      %p79 = por %p77, %p78
      %p80 = scmp.ne.s32.totalorder %s72, %s74
      %p81 = scmp.eq.s32.totalorder %s22, 1
      %p82 = por %p80, %p81
      %p83 = scmp.ne.s32.totalorder %s74, %s75
      %p84 = scmp.eq.s32.totalorder %s22, 0
      %p85 = por %p83, %p84
      %p86 = scmp.ne.s32.totalorder %s74, %s75
      %p87 = scmp.eq.s32.totalorder %s23, 1
      %p88 = por %p86, %p87
      %p90 = scmp.ne.s32.totalorder %s75, %s89
      %p91 = scmp.eq.s32.totalorder %s23, 0
      %p92 = por %p90, %p91
      %s93 = ssub.s32 %s17, %s24
      %p94 = scmp.eq.s32.totalorder %s93, 0
      %s96 = sadd.s32 %s95, 1
      %s97 = scalar_select %p94, %s95, %s96
      %p100 = pneg %p94
      %p101 = scmp.eq.s32.totalorder %s17, 1
      %p102 = por %p100, %p101
      %p103 = scmp.ne.s32.totalorder %s95, %s98
      %p104 = scmp.eq.s32.totalorder %s17, 0
      %p105 = por %p103, %p104
      %p106 = scmp.ne.s32.totalorder %s95, %s98
      %p107 = scmp.eq.s32.totalorder %s22, 1
      %p108 = por %p106, %p107
      %p109 = scmp.ne.s32.totalorder %s98, %s99
      %p110 = scmp.eq.s32.totalorder %s22, 0
      %p111 = por %p109, %p110
      %p112 = scmp.ne.s32.totalorder %s98, %s99
      %p113 = scmp.eq.s32.totalorder %s23, 1
      %p114 = por %p112, %p113
      %p116 = scmp.ne.s32.totalorder %s99, %s115
      %p117 = scmp.eq.s32.totalorder %s23, 0
      %p118 = por %p116, %p117
      %s119 = ssub.s32 %s17, %s24
      %p120 = scmp.eq.s32.totalorder %s119, 0
      %s122 = sadd.s32 %s121, 1
      %s123 = scalar_select %p120, %s121, %s122
      %p126 = pneg %p120
      %p127 = scmp.eq.s32.totalorder %s17, 1
      %p128 = por %p126, %p127
      %p129 = scmp.ne.s32.totalorder %s121, %s124
      %p130 = scmp.eq.s32.totalorder %s17, 0
      %p131 = por %p129, %p130
      %p132 = scmp.ne.s32.totalorder %s121, %s124
      %p133 = scmp.eq.s32.totalorder %s22, 1
      %p134 = por %p132, %p133
      %p135 = scmp.ne.s32.totalorder %s124, %s125
      %p136 = scmp.eq.s32.totalorder %s22, 0
      %p137 = por %p135, %p136
      %p138 = scmp.ne.s32.totalorder %s124, %s125
      %p139 = scmp.eq.s32.totalorder %s23, 1
      %p140 = por %p138, %p139
      %p142 = scmp.ne.s32.totalorder %s125, %s141
      %p143 = scmp.eq.s32.totalorder %s23, 0
      %p144 = por %p142, %p143
      %p145 = scmp.le.s32.totalorder 1, %s17
      %p146 = scmp.lt.s32.totalorder %s17, 3
      %p147 = pnand %p145, %p146
      %p148 = pneg %p147
      // Predicated region
      $region9: #{tpu_custom_call.1} parent=5 // pred_check
        _
      $region10: #{tpu_custom_call.1} parent=5 // pred_check_branch
        %150 = sbr.rel (%p147) target = $region12
      $region11: #{tpu_custom_call.1} parent=5 // pred_region
        %s151 = ssub.s32 %s17, 1
        // Predicated region
        $region13: #{tpu_custom_call.1} parent=11 // pred_check
          %p152 = pneg %p64
        $region14: #{tpu_custom_call.1} parent=11 // pred_check_branch
          %154 = sbr.rel (%p152) target = $region16
        $region15: #{tpu_custom_call.1} parent=11 // pred_region
          %s156 = ssub.s32 32768, 32768
          %157 = vsyncadd [#allocation6], %s156
          %s158 = sshll.u32 [#allocation5], 4
          %s159 = int_to_ptr.vmem [resolvable:$true] %s158
          %164 = dma.hbm_to_vmem [thread:$0]  %s1, 32768, %s159, [#allocation6], 512, 512, 32
        $region16: #{tpu_custom_call.1} parent=11 // pred_fallthru
          _
        // Predicated region
        $region17: #{tpu_custom_call.1} parent=11 // pred_check
          %p165 = pneg %p85
        $region18: #{tpu_custom_call.1} parent=11 // pred_check_branch
          %167 = sbr.rel (%p165) target = $region20
        $region19: #{tpu_custom_call.1} parent=11 // pred_region
          _
        $region20: #{tpu_custom_call.1} parent=11 // pred_fallthru
          _
      $region12: #{tpu_custom_call.1} parent=5 // pred_fallthru
        _
      %p168 = scmp.lt.s32.totalorder %s17, 2
      // Predicated region
      $region21: #{tpu_custom_call.1} parent=5 // pred_check
        %p169 = pneg %p168
      $region22: #{tpu_custom_call.1} parent=5 // pred_check_branch
        %171 = sbr.rel (%p169) target = $region24
      $region23: #{tpu_custom_call.1} parent=5 // pred_region
        // Predicated region
        $region25: #{tpu_custom_call.1} parent=23 // pred_check
          %p172 = pneg %p37
        $region26: #{tpu_custom_call.1} parent=23 // pred_check_branch
          %174 = sbr.rel (%p172) target = $region28
        $region27: #{tpu_custom_call.1} parent=23 // pred_region
          %s175 = sand.u32 %s17, 1
          %s176 = scalar_lea.sflag [#allocation3], %s175
          %s177 = sand.u32 %s27, 1
          %s178 = smul.addr %s177, 1024
          %s179 = scalar_lea.vmem [#allocation2], %s178
          %s180 = smul.u32 32, %s17
          %s182 = ssub.s32 16384, 16384
          %183 = vsyncadd %s176, %s182
          %s184 = smul.addr %s180, 4
          %s185 = smul.addr %s184, 128
          %s186 = scalar_lea.hbm %s0, %s185
          %s187 = sshll.u32 %s179, 4
          %s188 = int_to_ptr.vmem [resolvable:$true] %s187
          %193 = dma.hbm_to_vmem [thread:$0]  %s186, 16384, %s188, %s176, 512, 512, 32
        $region28: #{tpu_custom_call.1} parent=23 // pred_fallthru
          _
        // Predicated region
        $region29: #{tpu_custom_call.1} parent=23 // pred_check
          %p194 = pneg %p105
        $region30: #{tpu_custom_call.1} parent=23 // pred_check_branch
          %196 = sbr.rel (%p194) target = $region32
        $region31: #{tpu_custom_call.1} parent=23 // pred_region
          %s197 = sand.u32 %s17, 1
          %s198 = scalar_lea.sflag [#allocation3], %s197
          %s199 = sand.u32 %s95, 1
          %s200 = smul.addr %s199, 512
          %s201 = scalar_lea.vmem [#allocation7], %s200
          %s202 = smul.u32 32, %s17
          %s204 = ssub.s32 8192, 8192
          %205 = vsyncadd %s198, %s204
          %s206 = smul.addr %s202, 4
          %s207 = smul.addr %s206, 64
          %s208 = scalar_lea.hbm %s3, %s207
          %s209 = sshll.u32 %s201, 4
          %s210 = int_to_ptr.vmem [resolvable:$true] %s209
          %215 = dma.hbm_to_vmem [thread:$0]  %s208, 8192, %s210, %s198, 256, 256, 16
        $region32: #{tpu_custom_call.1} parent=23 // pred_fallthru
          _
      $region24: #{tpu_custom_call.1} parent=5 // pred_fallthru
        _
      %p216 = scmp.le.s32.totalorder 1, %s17
      %p217 = scmp.lt.s32.totalorder %s17, 3
      %p218 = pnand %p216, %p217
      %p219 = pneg %p218
      // Predicated region
      $region33: #{tpu_custom_call.1} parent=5 // pred_check
        _
      $region34: #{tpu_custom_call.1} parent=5 // pred_check_branch
        %221 = sbr.rel (%p218) target = $region36
      $region35: #{tpu_custom_call.1} parent=5 // pred_region
        %s222 = ssub.s32 %s17, 1
        %s223 = sand.u32 %s22, 1
        %s224 = scalar_lea.sflag [#allocation3], %s223
        %s225 = sand.u32 %s30, 1
        %s226 = smul.addr %s225, 1024
        %s227 = scalar_lea.vmem [#allocation2], %s226
        // Predicated region
        $region37: #{tpu_custom_call.1} parent=35 // pred_check
          %p228 = pneg %p43
        $region38: #{tpu_custom_call.1} parent=35 // pred_check_branch
          %230 = sbr.rel (%p228) target = $region40
        $region39: #{tpu_custom_call.1} parent=35 // pred_region
          %231 = dma.done %s224, 16384
        $region40: #{tpu_custom_call.1} parent=35 // pred_fallthru
          _
        // Predicated region
        $region41: #{tpu_custom_call.1} parent=35 // pred_check
          %p232 = pneg %p64
        $region42: #{tpu_custom_call.1} parent=35 // pred_check_branch
          %234 = sbr.rel (%p232) target = $region44
        $region43: #{tpu_custom_call.1} parent=35 // pred_region
          %235 = dma.done [#allocation6], 32768
        $region44: #{tpu_custom_call.1} parent=35 // pred_fallthru
          _
        %s236 = sand.u32 %s22, 1
        %s237 = scalar_lea.sflag [#allocation3], %s236
        %s238 = sand.u32 %s98, 1
        %s239 = smul.addr %s238, 512
        %s240 = scalar_lea.vmem [#allocation7], %s239
        // Predicated region
        $region45: #{tpu_custom_call.1} parent=35 // pred_check
          %p241 = pneg %p111
        $region46: #{tpu_custom_call.1} parent=35 // pred_check_branch
          %243 = sbr.rel (%p241) target = $region48
        $region47: #{tpu_custom_call.1} parent=35 // pred_region
          %244 = dma.done %s237, 8192
        $region48: #{tpu_custom_call.1} parent=35 // pred_fallthru
          _
        %s245 = sand.u32 %s22, 1
        %s246 = scalar_lea.sflag [#allocation3], %s245
        %s247 = sand.u32 %s30, 1
        %s248 = smul.addr %s247, 1024
        %s249 = scalar_lea.vmem [#allocation2], %s248
        %p250 = pneg %p43
        %p251 = pneg %p40
        %p252 = pneg %p64
        %p253 = pneg %p61
        %p254 = pneg %p85
        %p255 = pneg %p82
        %s256 = sand.u32 %s22, 1
        %s257 = scalar_lea.sflag [#allocation3], %s256
        %s258 = sand.u32 %s98, 1
        %s259 = smul.addr %s258, 512
        %s260 = scalar_lea.vmem [#allocation7], %s259
        %p261 = pneg %p111
        %p262 = pneg %p108
        %p263 = pneg %p137
        %p264 = pneg %p134
        %s265 = sand.u32 %s124, 1
        %s266 = scalar_lea.sflag [#allocation4], %s265
        %s267 = sand.u32 %s124, 1
        %s268 = smul.addr %s267, 1024
        %s269 = scalar_lea.vmem [#allocation8], %s268
        %s270 = smul.u32 32, %s22
        %s271 = smul.u32 32, %s22
        %s272 = smul.u32 32, %s22
        %v273 = vld [vmem:[%s227] sm:$0xff]
        %v274 = vld [vmem:[%s227 + $0x8] sm:$0xff]
        %v275 = vld [vmem:[%s227 + $0x10] sm:$0xff]
        %v276 = vld [vmem:[%s227 + $0x18] sm:$0xff]
        %v277 = vld [vmem:[%s227 + $0x20] sm:$0xff]
        %v278 = vld [vmem:[%s227 + $0x28] sm:$0xff]
        %v279 = vld [vmem:[%s227 + $0x30] sm:$0xff]
        %v280 = vld [vmem:[%s227 + $0x38] sm:$0xff]
        %v281 = vld [vmem:[%s227 + $0x40] sm:$0xff]
        %v282 = vld [vmem:[%s227 + $0x48] sm:$0xff]
        %v283 = vld [vmem:[%s227 + $0x50] sm:$0xff]
        %v284 = vld [vmem:[%s227 + $0x58] sm:$0xff]
        %v285 = vld [vmem:[%s227 + $0x60] sm:$0xff]
        %v286 = vld [vmem:[%s227 + $0x68] sm:$0xff]
        %v287 = vld [vmem:[%s227 + $0x70] sm:$0xff]
        %v288 = vld [vmem:[%s227 + $0x78] sm:$0xff]
        %v289 = vld [vmem:[%s227 + $0x80] sm:$0xff]
        %v290 = vld [vmem:[%s227 + $0x88] sm:$0xff]
        %v291 = vld [vmem:[%s227 + $0x90] sm:$0xff]
        %v292 = vld [vmem:[%s227 + $0x98] sm:$0xff]
        %v293 = vld [vmem:[%s227 + $0xa0] sm:$0xff]
        %v294 = vld [vmem:[%s227 + $0xa8] sm:$0xff]
        %v295 = vld [vmem:[%s227 + $0xb0] sm:$0xff]
        %v296 = vld [vmem:[%s227 + $0xb8] sm:$0xff]
        %v297 = vld [vmem:[%s227 + $0xc0] sm:$0xff]
        %v298 = vld [vmem:[%s227 + $0xc8] sm:$0xff]
        %v299 = vld [vmem:[%s227 + $0xd0] sm:$0xff]
        %v300 = vld [vmem:[%s227 + $0xd8] sm:$0xff]
        %v301 = vld [vmem:[%s227 + $0xe0] sm:$0xff]
        %v302 = vld [vmem:[%s227 + $0xe8] sm:$0xff]
        %v303 = vld [vmem:[%s227 + $0xf0] sm:$0xff]
        %v304 = vld [vmem:[%s227 + $0xf8] sm:$0xff]
        %v305 = vld [vmem:[%s227 + $0x100] sm:$0xff]
        %v306 = vld [vmem:[%s227 + $0x108] sm:$0xff]
        %v307 = vld [vmem:[%s227 + $0x110] sm:$0xff]
        %v308 = vld [vmem:[%s227 + $0x118] sm:$0xff]
        %v309 = vld [vmem:[%s227 + $0x120] sm:$0xff]
        %v310 = vld [vmem:[%s227 + $0x128] sm:$0xff]
        %v311 = vld [vmem:[%s227 + $0x130] sm:$0xff]
        %v312 = vld [vmem:[%s227 + $0x138] sm:$0xff]
        %v313 = vld [vmem:[%s227 + $0x140] sm:$0xff]
        %v314 = vld [vmem:[%s227 + $0x148] sm:$0xff]
        %v315 = vld [vmem:[%s227 + $0x150] sm:$0xff]
        %v316 = vld [vmem:[%s227 + $0x158] sm:$0xff]
        %v317 = vld [vmem:[%s227 + $0x160] sm:$0xff]
        %v318 = vld [vmem:[%s227 + $0x168] sm:$0xff]
        %v319 = vld [vmem:[%s227 + $0x170] sm:$0xff]
        %v320 = vld [vmem:[%s227 + $0x178] sm:$0xff]
        %v321 = vld [vmem:[%s227 + $0x180] sm:$0xff]
        %v322 = vld [vmem:[%s227 + $0x188] sm:$0xff]
        %v323 = vld [vmem:[%s227 + $0x190] sm:$0xff]
        %v324 = vld [vmem:[%s227 + $0x198] sm:$0xff]
        %v325 = vld [vmem:[%s227 + $0x1a0] sm:$0xff]
        %v326 = vld [vmem:[%s227 + $0x1a8] sm:$0xff]
        %v327 = vld [vmem:[%s227 + $0x1b0] sm:$0xff]
        %v328 = vld [vmem:[%s227 + $0x1b8] sm:$0xff]
        %v329 = vld [vmem:[%s227 + $0x1c0] sm:$0xff]
        %v330 = vld [vmem:[%s227 + $0x1c8] sm:$0xff]
        %v331 = vld [vmem:[%s227 + $0x1d0] sm:$0xff]
        %v332 = vld [vmem:[%s227 + $0x1d8] sm:$0xff]
        %v333 = vld [vmem:[%s227 + $0x1e0] sm:$0xff]
        %v334 = vld [vmem:[%s227 + $0x1e8] sm:$0xff]
        %v335 = vld [vmem:[%s227 + $0x1f0] sm:$0xff]
        %v336 = vld [vmem:[%s227 + $0x1f8] sm:$0xff]
        %v337 = vld [vmem:[%s227 + $0x200] sm:$0xff]
        %v338 = vld [vmem:[%s227 + $0x208] sm:$0xff]
        %v339 = vld [vmem:[%s227 + $0x210] sm:$0xff]
        %v340 = vld [vmem:[%s227 + $0x218] sm:$0xff]
        %v341 = vld [vmem:[%s227 + $0x220] sm:$0xff]
        %v342 = vld [vmem:[%s227 + $0x228] sm:$0xff]
        %v343 = vld [vmem:[%s227 + $0x230] sm:$0xff]
        %v344 = vld [vmem:[%s227 + $0x238] sm:$0xff]
        %v345 = vld [vmem:[%s227 + $0x240] sm:$0xff]
        %v346 = vld [vmem:[%s227 + $0x248] sm:$0xff]
        %v347 = vld [vmem:[%s227 + $0x250] sm:$0xff]
        %v348 = vld [vmem:[%s227 + $0x258] sm:$0xff]
        %v349 = vld [vmem:[%s227 + $0x260] sm:$0xff]
        %v350 = vld [vmem:[%s227 + $0x268] sm:$0xff]
        %v351 = vld [vmem:[%s227 + $0x270] sm:$0xff]
        %v352 = vld [vmem:[%s227 + $0x278] sm:$0xff]
        %v353 = vld [vmem:[%s227 + $0x280] sm:$0xff]
        %v354 = vld [vmem:[%s227 + $0x288] sm:$0xff]
        %v355 = vld [vmem:[%s227 + $0x290] sm:$0xff]
        %v356 = vld [vmem:[%s227 + $0x298] sm:$0xff]
        %v357 = vld [vmem:[%s227 + $0x2a0] sm:$0xff]
        %v358 = vld [vmem:[%s227 + $0x2a8] sm:$0xff]
        %v359 = vld [vmem:[%s227 + $0x2b0] sm:$0xff]
        %v360 = vld [vmem:[%s227 + $0x2b8] sm:$0xff]
        %v361 = vld [vmem:[%s227 + $0x2c0] sm:$0xff]
        %v362 = vld [vmem:[%s227 + $0x2c8] sm:$0xff]
        %v363 = vld [vmem:[%s227 + $0x2d0] sm:$0xff]
        %v364 = vld [vmem:[%s227 + $0x2d8] sm:$0xff]
        %v365 = vld [vmem:[%s227 + $0x2e0] sm:$0xff]
        %v366 = vld [vmem:[%s227 + $0x2e8] sm:$0xff]
        %v367 = vld [vmem:[%s227 + $0x2f0] sm:$0xff]
        %v368 = vld [vmem:[%s227 + $0x2f8] sm:$0xff]
        %v369 = vld [vmem:[%s227 + $0x300] sm:$0xff]
        %v370 = vld [vmem:[%s227 + $0x308] sm:$0xff]
        %v371 = vld [vmem:[%s227 + $0x310] sm:$0xff]
        %v372 = vld [vmem:[%s227 + $0x318] sm:$0xff]
        %v373 = vld [vmem:[%s227 + $0x320] sm:$0xff]
        %v374 = vld [vmem:[%s227 + $0x328] sm:$0xff]
        %v375 = vld [vmem:[%s227 + $0x330] sm:$0xff]
        %v376 = vld [vmem:[%s227 + $0x338] sm:$0xff]
        %v377 = vld [vmem:[%s227 + $0x340] sm:$0xff]
        %v378 = vld [vmem:[%s227 + $0x348] sm:$0xff]
        %v379 = vld [vmem:[%s227 + $0x350] sm:$0xff]
        %v380 = vld [vmem:[%s227 + $0x358] sm:$0xff]
        %v381 = vld [vmem:[%s227 + $0x360] sm:$0xff]
        %v382 = vld [vmem:[%s227 + $0x368] sm:$0xff]
        %v383 = vld [vmem:[%s227 + $0x370] sm:$0xff]
        %v384 = vld [vmem:[%s227 + $0x378] sm:$0xff]
        %v385 = vld [vmem:[%s227 + $0x380] sm:$0xff]
        %v386 = vld [vmem:[%s227 + $0x388] sm:$0xff]
        %v387 = vld [vmem:[%s227 + $0x390] sm:$0xff]
        %v388 = vld [vmem:[%s227 + $0x398] sm:$0xff]
        %v389 = vld [vmem:[%s227 + $0x3a0] sm:$0xff]
        %v390 = vld [vmem:[%s227 + $0x3a8] sm:$0xff]
        %v391 = vld [vmem:[%s227 + $0x3b0] sm:$0xff]
        %v392 = vld [vmem:[%s227 + $0x3b8] sm:$0xff]
        %v393 = vld [vmem:[%s227 + $0x3c0] sm:$0xff]
        %v394 = vld [vmem:[%s227 + $0x3c8] sm:$0xff]
        %v395 = vld [vmem:[%s227 + $0x3d0] sm:$0xff]
        %v396 = vld [vmem:[%s227 + $0x3d8] sm:$0xff]
        %v397 = vld [vmem:[%s227 + $0x3e0] sm:$0xff]
        %v398 = vld [vmem:[%s227 + $0x3e8] sm:$0xff]
        %v399 = vld [vmem:[%s227 + $0x3f0] sm:$0xff]
        %v400 = vld [vmem:[%s227 + $0x3f8] sm:$0xff]
        %v401 = vld [vmem:[#allocation5] sm:$0xff]
        %v402 = vld [vmem:[#allocation5 + $0x8] sm:$0xff]
        %v403 = vld [vmem:[#allocation5 + $0x10] sm:$0xff]
        %v404 = vld [vmem:[#allocation5 + $0x18] sm:$0xff]
        %v405 = vld [vmem:[#allocation5 + $0x20] sm:$0xff]
        %v406 = vld [vmem:[#allocation5 + $0x28] sm:$0xff]
        %v407 = vld [vmem:[#allocation5 + $0x30] sm:$0xff]
        %v408 = vld [vmem:[#allocation5 + $0x38] sm:$0xff]
        %v409 = vld [vmem:[#allocation5 + $0x40] sm:$0xff]
        %v410 = vld [vmem:[#allocation5 + $0x48] sm:$0xff]
        %v411 = vld [vmem:[#allocation5 + $0x50] sm:$0xff]
        %v412 = vld [vmem:[#allocation5 + $0x58] sm:$0xff]
        %v413 = vld [vmem:[#allocation5 + $0x60] sm:$0xff]
        %v414 = vld [vmem:[#allocation5 + $0x68] sm:$0xff]
        %v415 = vld [vmem:[#allocation5 + $0x70] sm:$0xff]
        %v416 = vld [vmem:[#allocation5 + $0x78] sm:$0xff]
        %v417 = vld [vmem:[#allocation5 + $0x80] sm:$0xff]
        %v418 = vld [vmem:[#allocation5 + $0x88] sm:$0xff]
        %v419 = vld [vmem:[#allocation5 + $0x90] sm:$0xff]
        %v420 = vld [vmem:[#allocation5 + $0x98] sm:$0xff]
        %v421 = vld [vmem:[#allocation5 + $0xa0] sm:$0xff]
        %v422 = vld [vmem:[#allocation5 + $0xa8] sm:$0xff]
        %v423 = vld [vmem:[#allocation5 + $0xb0] sm:$0xff]
        %v424 = vld [vmem:[#allocation5 + $0xb8] sm:$0xff]
        %v425 = vld [vmem:[#allocation5 + $0xc0] sm:$0xff]
        %v426 = vld [vmem:[#allocation5 + $0xc8] sm:$0xff]
        %v427 = vld [vmem:[#allocation5 + $0xd0] sm:$0xff]
        %v428 = vld [vmem:[#allocation5 + $0xd8] sm:$0xff]
        %v429 = vld [vmem:[#allocation5 + $0xe0] sm:$0xff]
        %v430 = vld [vmem:[#allocation5 + $0xe8] sm:$0xff]
        %v431 = vld [vmem:[#allocation5 + $0xf0] sm:$0xff]
        %v432 = vld [vmem:[#allocation5 + $0xf8] sm:$0xff]
        %v433 = vld [vmem:[#allocation5 + $0x100] sm:$0xff]
        %v434 = vld [vmem:[#allocation5 + $0x108] sm:$0xff]
        %v435 = vld [vmem:[#allocation5 + $0x110] sm:$0xff]
        %v436 = vld [vmem:[#allocation5 + $0x118] sm:$0xff]
        %v437 = vld [vmem:[#allocation5 + $0x120] sm:$0xff]
        %v438 = vld [vmem:[#allocation5 + $0x128] sm:$0xff]
        %v439 = vld [vmem:[#allocation5 + $0x130] sm:$0xff]
        %v440 = vld [vmem:[#allocation5 + $0x138] sm:$0xff]
        %v441 = vld [vmem:[#allocation5 + $0x140] sm:$0xff]
        %v442 = vld [vmem:[#allocation5 + $0x148] sm:$0xff]
        %v443 = vld [vmem:[#allocation5 + $0x150] sm:$0xff]
        %v444 = vld [vmem:[#allocation5 + $0x158] sm:$0xff]
        %v445 = vld [vmem:[#allocation5 + $0x160] sm:$0xff]
        %v446 = vld [vmem:[#allocation5 + $0x168] sm:$0xff]
        %v447 = vld [vmem:[#allocation5 + $0x170] sm:$0xff]
        %v448 = vld [vmem:[#allocation5 + $0x178] sm:$0xff]
        %v449 = vld [vmem:[#allocation5 + $0x180] sm:$0xff]
        %v450 = vld [vmem:[#allocation5 + $0x188] sm:$0xff]
        %v451 = vld [vmem:[#allocation5 + $0x190] sm:$0xff]
        %v452 = vld [vmem:[#allocation5 + $0x198] sm:$0xff]
        %v453 = vld [vmem:[#allocation5 + $0x1a0] sm:$0xff]
        %v454 = vld [vmem:[#allocation5 + $0x1a8] sm:$0xff]
        %v455 = vld [vmem:[#allocation5 + $0x1b0] sm:$0xff]
        %v456 = vld [vmem:[#allocation5 + $0x1b8] sm:$0xff]
        %v457 = vld [vmem:[#allocation5 + $0x1c0] sm:$0xff]
        %v458 = vld [vmem:[#allocation5 + $0x1c8] sm:$0xff]
        %v459 = vld [vmem:[#allocation5 + $0x1d0] sm:$0xff]
        %v460 = vld [vmem:[#allocation5 + $0x1d8] sm:$0xff]
        %v461 = vld [vmem:[#allocation5 + $0x1e0] sm:$0xff]
        %v462 = vld [vmem:[#allocation5 + $0x1e8] sm:$0xff]
        %v463 = vld [vmem:[#allocation5 + $0x1f0] sm:$0xff]
        %v464 = vld [vmem:[#allocation5 + $0x1f8] sm:$0xff]
        %v465 = vld [vmem:[#allocation5 + $0x200] sm:$0xff]
        %v466 = vld [vmem:[#allocation5 + $0x208] sm:$0xff]
        %v467 = vld [vmem:[#allocation5 + $0x210] sm:$0xff]
        %v468 = vld [vmem:[#allocation5 + $0x218] sm:$0xff]
        %v469 = vld [vmem:[#allocation5 + $0x220] sm:$0xff]
        %v470 = vld [vmem:[#allocation5 + $0x228] sm:$0xff]
        %v471 = vld [vmem:[#allocation5 + $0x230] sm:$0xff]
        %v472 = vld [vmem:[#allocation5 + $0x238] sm:$0xff]
        %v473 = vld [vmem:[#allocation5 + $0x240] sm:$0xff]
        %v474 = vld [vmem:[#allocation5 + $0x248] sm:$0xff]
        %v475 = vld [vmem:[#allocation5 + $0x250] sm:$0xff]
        %v476 = vld [vmem:[#allocation5 + $0x258] sm:$0xff]
        %v477 = vld [vmem:[#allocation5 + $0x260] sm:$0xff]
        %v478 = vld [vmem:[#allocation5 + $0x268] sm:$0xff]
        %v479 = vld [vmem:[#allocation5 + $0x270] sm:$0xff]
        %v480 = vld [vmem:[#allocation5 + $0x278] sm:$0xff]
        %v481 = vld [vmem:[#allocation5 + $0x280] sm:$0xff]
        %v482 = vld [vmem:[#allocation5 + $0x288] sm:$0xff]
        %v483 = vld [vmem:[#allocation5 + $0x290] sm:$0xff]
        %v484 = vld [vmem:[#allocation5 + $0x298] sm:$0xff]
        %v485 = vld [vmem:[#allocation5 + $0x2a0] sm:$0xff]
        %v486 = vld [vmem:[#allocation5 + $0x2a8] sm:$0xff]
        %v487 = vld [vmem:[#allocation5 + $0x2b0] sm:$0xff]
        %v488 = vld [vmem:[#allocation5 + $0x2b8] sm:$0xff]
        %v489 = vld [vmem:[#allocation5 + $0x2c0] sm:$0xff]
        %v490 = vld [vmem:[#allocation5 + $0x2c8] sm:$0xff]
        %v491 = vld [vmem:[#allocation5 + $0x2d0] sm:$0xff]
        %v492 = vld [vmem:[#allocation5 + $0x2d8] sm:$0xff]
        %v493 = vld [vmem:[#allocation5 + $0x2e0] sm:$0xff]
        %v494 = vld [vmem:[#allocation5 + $0x2e8] sm:$0xff]
        %v495 = vld [vmem:[#allocation5 + $0x2f0] sm:$0xff]
        %v496 = vld [vmem:[#allocation5 + $0x2f8] sm:$0xff]
        %v497 = vld [vmem:[#allocation5 + $0x300] sm:$0xff]
        %v498 = vld [vmem:[#allocation5 + $0x308] sm:$0xff]
        %v499 = vld [vmem:[#allocation5 + $0x310] sm:$0xff]
        %v500 = vld [vmem:[#allocation5 + $0x318] sm:$0xff]
        %v501 = vld [vmem:[#allocation5 + $0x320] sm:$0xff]
        %v502 = vld [vmem:[#allocation5 + $0x328] sm:$0xff]
        %v503 = vld [vmem:[#allocation5 + $0x330] sm:$0xff]
        %v504 = vld [vmem:[#allocation5 + $0x338] sm:$0xff]
        %v505 = vld [vmem:[#allocation5 + $0x340] sm:$0xff]
        %v506 = vld [vmem:[#allocation5 + $0x348] sm:$0xff]
        %v507 = vld [vmem:[#allocation5 + $0x350] sm:$0xff]
        %v508 = vld [vmem:[#allocation5 + $0x358] sm:$0xff]
        %v509 = vld [vmem:[#allocation5 + $0x360] sm:$0xff]
        %v510 = vld [vmem:[#allocation5 + $0x368] sm:$0xff]
        %v511 = vld [vmem:[#allocation5 + $0x370] sm:$0xff]
        %v512 = vld [vmem:[#allocation5 + $0x378] sm:$0xff]
        %v513 = vld [vmem:[#allocation5 + $0x380] sm:$0xff]
        %v514 = vld [vmem:[#allocation5 + $0x388] sm:$0xff]
        %v515 = vld [vmem:[#allocation5 + $0x390] sm:$0xff]
        %v516 = vld [vmem:[#allocation5 + $0x398] sm:$0xff]
        %v517 = vld [vmem:[#allocation5 + $0x3a0] sm:$0xff]
        %v518 = vld [vmem:[#allocation5 + $0x3a8] sm:$0xff]
        %v519 = vld [vmem:[#allocation5 + $0x3b0] sm:$0xff]
        %v520 = vld [vmem:[#allocation5 + $0x3b8] sm:$0xff]
        %v521 = vld [vmem:[#allocation5 + $0x3c0] sm:$0xff]
        %v522 = vld [vmem:[#allocation5 + $0x3c8] sm:$0xff]
        %v523 = vld [vmem:[#allocation5 + $0x3d0] sm:$0xff]
        %v524 = vld [vmem:[#allocation5 + $0x3d8] sm:$0xff]
        %v525 = vld [vmem:[#allocation5 + $0x3e0] sm:$0xff]
        %v526 = vld [vmem:[#allocation5 + $0x3e8] sm:$0xff]
        %v527 = vld [vmem:[#allocation5 + $0x3f0] sm:$0xff]
        %v528 = vld [vmem:[#allocation5 + $0x3f8] sm:$0xff]
        %v529 = vld [vmem:[#allocation5 + $0x400] sm:$0xff]
        %v530 = vld [vmem:[#allocation5 + $0x408] sm:$0xff]
        %v531 = vld [vmem:[#allocation5 + $0x410] sm:$0xff]
        %v532 = vld [vmem:[#allocation5 + $0x418] sm:$0xff]
        %v533 = vld [vmem:[#allocation5 + $0x420] sm:$0xff]
        %v534 = vld [vmem:[#allocation5 + $0x428] sm:$0xff]
        %v535 = vld [vmem:[#allocation5 + $0x430] sm:$0xff]
        %v536 = vld [vmem:[#allocation5 + $0x438] sm:$0xff]
        %v537 = vld [vmem:[#allocation5 + $0x440] sm:$0xff]
        %v538 = vld [vmem:[#allocation5 + $0x448] sm:$0xff]
        %v539 = vld [vmem:[#allocation5 + $0x450] sm:$0xff]
        %v540 = vld [vmem:[#allocation5 + $0x458] sm:$0xff]
        %v541 = vld [vmem:[#allocation5 + $0x460] sm:$0xff]
        %v542 = vld [vmem:[#allocation5 + $0x468] sm:$0xff]
        %v543 = vld [vmem:[#allocation5 + $0x470] sm:$0xff]
        %v544 = vld [vmem:[#allocation5 + $0x478] sm:$0xff]
        %v545 = vld [vmem:[#allocation5 + $0x480] sm:$0xff]
        %v546 = vld [vmem:[#allocation5 + $0x488] sm:$0xff]
        %v547 = vld [vmem:[#allocation5 + $0x490] sm:$0xff]
        %v548 = vld [vmem:[#allocation5 + $0x498] sm:$0xff]
        %v549 = vld [vmem:[#allocation5 + $0x4a0] sm:$0xff]
        %v550 = vld [vmem:[#allocation5 + $0x4a8] sm:$0xff]
        %v551 = vld [vmem:[#allocation5 + $0x4b0] sm:$0xff]
        %v552 = vld [vmem:[#allocation5 + $0x4b8] sm:$0xff]
        %v553 = vld [vmem:[#allocation5 + $0x4c0] sm:$0xff]
        %v554 = vld [vmem:[#allocation5 + $0x4c8] sm:$0xff]
        %v555 = vld [vmem:[#allocation5 + $0x4d0] sm:$0xff]
        %v556 = vld [vmem:[#allocation5 + $0x4d8] sm:$0xff]
        %v557 = vld [vmem:[#allocation5 + $0x4e0] sm:$0xff]
        %v558 = vld [vmem:[#allocation5 + $0x4e8] sm:$0xff]
        %v559 = vld [vmem:[#allocation5 + $0x4f0] sm:$0xff]
        %v560 = vld [vmem:[#allocation5 + $0x4f8] sm:$0xff]
        %v561 = vld [vmem:[#allocation5 + $0x500] sm:$0xff]
        %v562 = vld [vmem:[#allocation5 + $0x508] sm:$0xff]
        %v563 = vld [vmem:[#allocation5 + $0x510] sm:$0xff]
        %v564 = vld [vmem:[#allocation5 + $0x518] sm:$0xff]
        %v565 = vld [vmem:[#allocation5 + $0x520] sm:$0xff]
        %v566 = vld [vmem:[#allocation5 + $0x528] sm:$0xff]
        %v567 = vld [vmem:[#allocation5 + $0x530] sm:$0xff]
        %v568 = vld [vmem:[#allocation5 + $0x538] sm:$0xff]
        %v569 = vld [vmem:[#allocation5 + $0x540] sm:$0xff]
        %v570 = vld [vmem:[#allocation5 + $0x548] sm:$0xff]
        %v571 = vld [vmem:[#allocation5 + $0x550] sm:$0xff]
        %v572 = vld [vmem:[#allocation5 + $0x558] sm:$0xff]
        %v573 = vld [vmem:[#allocation5 + $0x560] sm:$0xff]
        %v574 = vld [vmem:[#allocation5 + $0x568] sm:$0xff]
        %v575 = vld [vmem:[#allocation5 + $0x570] sm:$0xff]
        %v576 = vld [vmem:[#allocation5 + $0x578] sm:$0xff]
        %v577 = vld [vmem:[#allocation5 + $0x580] sm:$0xff]
        %v578 = vld [vmem:[#allocation5 + $0x588] sm:$0xff]
        %v579 = vld [vmem:[#allocation5 + $0x590] sm:$0xff]
        %v580 = vld [vmem:[#allocation5 + $0x598] sm:$0xff]
        %v581 = vld [vmem:[#allocation5 + $0x5a0] sm:$0xff]
        %v582 = vld [vmem:[#allocation5 + $0x5a8] sm:$0xff]
        %v583 = vld [vmem:[#allocation5 + $0x5b0] sm:$0xff]
        %v584 = vld [vmem:[#allocation5 + $0x5b8] sm:$0xff]
        %v585 = vld [vmem:[#allocation5 + $0x5c0] sm:$0xff]
        %v586 = vld [vmem:[#allocation5 + $0x5c8] sm:$0xff]
        %v587 = vld [vmem:[#allocation5 + $0x5d0] sm:$0xff]
        %v588 = vld [vmem:[#allocation5 + $0x5d8] sm:$0xff]
        %v589 = vld [vmem:[#allocation5 + $0x5e0] sm:$0xff]
        %v590 = vld [vmem:[#allocation5 + $0x5e8] sm:$0xff]
        %v591 = vld [vmem:[#allocation5 + $0x5f0] sm:$0xff]
        %v592 = vld [vmem:[#allocation5 + $0x5f8] sm:$0xff]
        %v593 = vld [vmem:[#allocation5 + $0x600] sm:$0xff]
        %v594 = vld [vmem:[#allocation5 + $0x608] sm:$0xff]
        %v595 = vld [vmem:[#allocation5 + $0x610] sm:$0xff]
        %v596 = vld [vmem:[#allocation5 + $0x618] sm:$0xff]
        %v597 = vld [vmem:[#allocation5 + $0x620] sm:$0xff]
        %v598 = vld [vmem:[#allocation5 + $0x628] sm:$0xff]
        %v599 = vld [vmem:[#allocation5 + $0x630] sm:$0xff]
        %v600 = vld [vmem:[#allocation5 + $0x638] sm:$0xff]
        %v601 = vld [vmem:[#allocation5 + $0x640] sm:$0xff]
        %v602 = vld [vmem:[#allocation5 + $0x648] sm:$0xff]
        %v603 = vld [vmem:[#allocation5 + $0x650] sm:$0xff]
        %v604 = vld [vmem:[#allocation5 + $0x658] sm:$0xff]
        %v605 = vld [vmem:[#allocation5 + $0x660] sm:$0xff]
        %v606 = vld [vmem:[#allocation5 + $0x668] sm:$0xff]
        %v607 = vld [vmem:[#allocation5 + $0x670] sm:$0xff]
        %v608 = vld [vmem:[#allocation5 + $0x678] sm:$0xff]
        %v609 = vld [vmem:[#allocation5 + $0x680] sm:$0xff]
        %v610 = vld [vmem:[#allocation5 + $0x688] sm:$0xff]
        %v611 = vld [vmem:[#allocation5 + $0x690] sm:$0xff]
        %v612 = vld [vmem:[#allocation5 + $0x698] sm:$0xff]
        %v613 = vld [vmem:[#allocation5 + $0x6a0] sm:$0xff]
        %v614 = vld [vmem:[#allocation5 + $0x6a8] sm:$0xff]
        %v615 = vld [vmem:[#allocation5 + $0x6b0] sm:$0xff]
        %v616 = vld [vmem:[#allocation5 + $0x6b8] sm:$0xff]
        %v617 = vld [vmem:[#allocation5 + $0x6c0] sm:$0xff]
        %v618 = vld [vmem:[#allocation5 + $0x6c8] sm:$0xff]
        %v619 = vld [vmem:[#allocation5 + $0x6d0] sm:$0xff]
        %v620 = vld [vmem:[#allocation5 + $0x6d8] sm:$0xff]
        %v621 = vld [vmem:[#allocation5 + $0x6e0] sm:$0xff]
        %v622 = vld [vmem:[#allocation5 + $0x6e8] sm:$0xff]
        %v623 = vld [vmem:[#allocation5 + $0x6f0] sm:$0xff]
        %v624 = vld [vmem:[#allocation5 + $0x6f8] sm:$0xff]
        %v625 = vld [vmem:[#allocation5 + $0x700] sm:$0xff]
        %v626 = vld [vmem:[#allocation5 + $0x708] sm:$0xff]
        %v627 = vld [vmem:[#allocation5 + $0x710] sm:$0xff]
        %v628 = vld [vmem:[#allocation5 + $0x718] sm:$0xff]
        %v629 = vld [vmem:[#allocation5 + $0x720] sm:$0xff]
        %v630 = vld [vmem:[#allocation5 + $0x728] sm:$0xff]
        %v631 = vld [vmem:[#allocation5 + $0x730] sm:$0xff]
        %v632 = vld [vmem:[#allocation5 + $0x738] sm:$0xff]
        %v633 = vld [vmem:[#allocation5 + $0x740] sm:$0xff]
        %v634 = vld [vmem:[#allocation5 + $0x748] sm:$0xff]
        %v635 = vld [vmem:[#allocation5 + $0x750] sm:$0xff]
        %v636 = vld [vmem:[#allocation5 + $0x758] sm:$0xff]
        %v637 = vld [vmem:[#allocation5 + $0x760] sm:$0xff]
        %v638 = vld [vmem:[#allocation5 + $0x768] sm:$0xff]
        %v639 = vld [vmem:[#allocation5 + $0x770] sm:$0xff]
        %v640 = vld [vmem:[#allocation5 + $0x778] sm:$0xff]
        %v641 = vld [vmem:[#allocation5 + $0x780] sm:$0xff]
        %v642 = vld [vmem:[#allocation5 + $0x788] sm:$0xff]
        %v643 = vld [vmem:[#allocation5 + $0x790] sm:$0xff]
        %v644 = vld [vmem:[#allocation5 + $0x798] sm:$0xff]
        %v645 = vld [vmem:[#allocation5 + $0x7a0] sm:$0xff]
        %v646 = vld [vmem:[#allocation5 + $0x7a8] sm:$0xff]
        %v647 = vld [vmem:[#allocation5 + $0x7b0] sm:$0xff]
        %v648 = vld [vmem:[#allocation5 + $0x7b8] sm:$0xff]
        %v649 = vld [vmem:[#allocation5 + $0x7c0] sm:$0xff]
        %v650 = vld [vmem:[#allocation5 + $0x7c8] sm:$0xff]
        %v651 = vld [vmem:[#allocation5 + $0x7d0] sm:$0xff]
        %v652 = vld [vmem:[#allocation5 + $0x7d8] sm:$0xff]
        %v653 = vld [vmem:[#allocation5 + $0x7e0] sm:$0xff]
        %v654 = vld [vmem:[#allocation5 + $0x7e8] sm:$0xff]
        %v655 = vld [vmem:[#allocation5 + $0x7f0] sm:$0xff]
        %v656 = vld [vmem:[#allocation5 + $0x7f8] sm:$0xff]
        %v657 = vld [vmem:[%s2] sm:$0xf]
        %v659 = vlaneseq
        %v660 = vshrl.u32 %v659, 7
        %v661 = vsub.s32 0, %v660
        %v662 = vrot.slane %v657, %v661
        %v663 = vlaneseq
        %v664 = vshrl.u32 %v663, 7
        %v665 = vsub.s32 1, %v664
        %v666 = vrot.slane %v657, %v665
        %v667 = vlaneseq
        %v668 = vshrl.u32 %v667, 7
        %v669 = vsub.s32 2, %v668
        %v670 = vrot.slane %v657, %v669
        %v671 = vlaneseq
        %v672 = vshrl.u32 %v671, 7
        %v673 = vsub.s32 3, %v672
        %v674 = vrot.slane %v657, %v673
        %679 = vmatprep.subr.mxu0 %v402
        %680 = vmatpush1.msra.mxu0 %v401
        %681 = vmatprep.subr.mxu0 %v406
        %682 = vmatpush1.msra.mxu0 %v405
        %683 = vmatprep.subr.mxu0 %v410
        %684 = vmatpush1.msra.mxu0 %v409
        %685 = vmatprep.subr.mxu0 %v414
        %686 = vmatpush1.msra.mxu0 %v413
        %687 = vmatprep.subr.mxu0 %v418
        %688 = vmatpush1.msra.mxu0 %v417
        %689 = vmatprep.subr.mxu0 %v422
        %690 = vmatpush1.msra.mxu0 %v421
        %691 = vmatprep.subr.mxu0 %v426
        %692 = vmatpush1.msra.mxu0 %v425
        %693 = vmatprep.subr.mxu0 %v430
        %694 = vmatpush1.msra.mxu0 %v429
        %695 = vmatprep.subr.mxu0 %v434
        %696 = vmatpush1.msra.mxu0 %v433
        %697 = vmatprep.subr.mxu0 %v438
        %698 = vmatpush1.msra.mxu0 %v437
        %699 = vmatprep.subr.mxu0 %v442
        %700 = vmatpush1.msra.mxu0 %v441
        %701 = vmatprep.subr.mxu0 %v446
        %702 = vmatpush1.msra.mxu0 %v445
        %703 = vmatprep.subr.mxu0 %v450
        %704 = vmatpush1.msra.mxu0 %v449
        %705 = vmatprep.subr.mxu0 %v454
        %706 = vmatpush1.msra.mxu0 %v453
        %707 = vmatprep.subr.mxu0 %v458
        %708 = vmatpush1.msra.mxu0 %v457
        %709 = vmatprep.subr.mxu0 %v462
        %710 = vmatpush1.msra.mxu0 %v461
        %711 = vmatprep.subr.mxu0 %v466
        %712 = vmatpush1.msra.mxu0 %v465
        %713 = vmatprep.subr.mxu0 %v470
        %714 = vmatpush1.msra.mxu0 %v469
        %715 = vmatprep.subr.mxu0 %v474
        %716 = vmatpush1.msra.mxu0 %v473
        %717 = vmatprep.subr.mxu0 %v478
        %718 = vmatpush1.msra.mxu0 %v477
        %719 = vmatprep.subr.mxu0 %v482
        %720 = vmatpush1.msra.mxu0 %v481
        %721 = vmatprep.subr.mxu0 %v486
        %722 = vmatpush1.msra.mxu0 %v485
        %723 = vmatprep.subr.mxu0 %v490
        %724 = vmatpush1.msra.mxu0 %v489
        %725 = vmatprep.subr.mxu0 %v494
        %726 = vmatpush1.msra.mxu0 %v493
        %727 = vmatprep.subr.mxu0 %v498
        %728 = vmatpush1.msra.mxu0 %v497
        %729 = vmatprep.subr.mxu0 %v502
        %730 = vmatpush1.msra.mxu0 %v501
        %731 = vmatprep.subr.mxu0 %v506
        %732 = vmatpush1.msra.mxu0 %v505
        %733 = vmatprep.subr.mxu0 %v510
        %734 = vmatpush1.msra.mxu0 %v509
        %735 = vmatprep.subr.mxu0 %v514
        %736 = vmatpush1.msra.mxu0 %v513
        %737 = vmatprep.subr.mxu0 %v518
        %738 = vmatpush1.msra.mxu0 %v517
        %739 = vmatprep.subr.mxu0 %v522
        %740 = vmatpush1.msra.mxu0 %v521
        %741 = vmatprep.subr.mxu0 %v526
        %742 = vmatpush1.msra.mxu0 %v525
        %743 = vmatprep.mubr.f32.mxu0 %v274
        %744 = vmatmul.mubr.f32.gmra.mrb[0].mxu0 %v273
        %v745 = vpop.f32.mrb[0].mxu0
        %v746 = vadd.f32 %v662, %v745
        %v747 = vpop.f32.mrb[0].mxu0
        %v748 = vadd.f32 %v666, %v747
        %749 = vmatprep.mubr.f32.mxu0 %v278
        %750 = vmatmul.mubr.f32.gmra.mrb[0].mxu0 %v277
        %v751 = vpop.f32.mrb[0].mxu0
        %v752 = vadd.f32 %v662, %v751
        %v753 = vpop.f32.mrb[0].mxu0
        %v754 = vadd.f32 %v666, %v753
        %755 = vmatprep.mubr.f32.mxu0 %v282
        %756 = vmatmul.mubr.f32.gmra.mrb[0].mxu0 %v281
        %v757 = vpop.f32.mrb[0].mxu0
        %v758 = vadd.f32 %v662, %v757
        %v759 = vpop.f32.mrb[0].mxu0
        %v760 = vadd.f32 %v666, %v759
        %761 = vmatprep.mubr.f32.mxu0 %v286
        %762 = vmatmul.mubr.f32.gmra.mrb[0].mxu0 %v285
        %v763 = vpop.f32.mrb[0].mxu0
        %v764 = vadd.f32 %v662, %v763
        %v765 = vpop.f32.mrb[0].mxu0
        %v766 = vadd.f32 %v666, %v765
        %767 = vmatprep.mubr.f32.mxu0 %v290
        %768 = vmatmul.mubr.f32.gmra.mrb[0].mxu0 %v289
        %v769 = vpop.f32.mrb[0].mxu0
        %v770 = vadd.f32 %v662, %v769
        %v771 = vpop.f32.mrb[0].mxu0
        %v772 = vadd.f32 %v666, %v771
        %773 = vmatprep.mubr.f32.mxu0 %v294
        %774 = vmatmul.mubr.f32.gmra.mrb[0].mxu0 %v293
        %v775 = vpop.f32.mrb[0].mxu0
        %v776 = vadd.f32 %v662, %v775
        %v777 = vpop.f32.mrb[0].mxu0
        %v778 = vadd.f32 %v666, %v777
        %779 = vmatprep.mubr.f32.mxu0 %v298
        %780 = vmatmul.mubr.f32.gmra.mrb[0].mxu0 %v297
        %v781 = vpop.f32.mrb[0].mxu0
        %v782 = vadd.f32 %v662, %v781
        %v783 = vpop.f32.mrb[0].mxu0
        %v784 = vadd.f32 %v666, %v783
        %785 = vmatprep.mubr.f32.mxu0 %v302
        %786 = vmatmul.mubr.f32.gmra.mrb[0].mxu0 %v301
        %v787 = vpop.f32.mrb[0].mxu0
        %v788 = vadd.f32 %v662, %v787
        %v789 = vpop.f32.mrb[0].mxu0
        %v790 = vadd.f32 %v666, %v789
        %791 = vmatprep.mubr.f32.mxu0 %v306
        %792 = vmatmul.mubr.f32.gmra.mrb[0].mxu0 %v305
        %v793 = vpop.f32.mrb[0].mxu0
        %v794 = vadd.f32 %v662, %v793
        %v795 = vpop.f32.mrb[0].mxu0
        %v796 = vadd.f32 %v666, %v795
        %797 = vmatprep.mubr.f32.mxu0 %v310
        %798 = vmatmul.mubr.f32.gmra.mrb[0].mxu0 %v309
        %v799 = vpop.f32.mrb[0].mxu0
        %v800 = vadd.f32 %v662, %v799
        %v801 = vpop.f32.mrb[0].mxu0
        %v802 = vadd.f32 %v666, %v801
        %803 = vmatprep.mubr.f32.mxu0 %v314
        %804 = vmatmul.mubr.f32.gmra.mrb[0].mxu0 %v313
        %v805 = vpop.f32.mrb[0].mxu0
        %v806 = vadd.f32 %v662, %v805
        %v807 = vpop.f32.mrb[0].mxu0
        %v808 = vadd.f32 %v666, %v807
        %809 = vmatprep.mubr.f32.mxu0 %v318
        %810 = vmatmul.mubr.f32.gmra.mrb[0].mxu0 %v317
        %v811 = vpop.f32.mrb[0].mxu0
        %v812 = vadd.f32 %v662, %v811
        %v813 = vpop.f32.mrb[0].mxu0
        %v814 = vadd.f32 %v666, %v813
        %815 = vmatprep.mubr.f32.mxu0 %v322
        %816 = vmatmul.mubr.f32.gmra.mrb[0].mxu0 %v321
        %v817 = vpop.f32.mrb[0].mxu0
        %v818 = vadd.f32 %v662, %v817
        %v819 = vpop.f32.mrb[0].mxu0
        %v820 = vadd.f32 %v666, %v819
        %821 = vmatprep.mubr.f32.mxu0 %v326
        %822 = vmatmul.mubr.f32.gmra.mrb[0].mxu0 %v325
        %v823 = vpop.f32.mrb[0].mxu0
        %v824 = vadd.f32 %v662, %v823
        %v825 = vpop.f32.mrb[0].mxu0
        %v826 = vadd.f32 %v666, %v825
        %827 = vmatprep.mubr.f32.mxu0 %v330
        %828 = vmatmul.mubr.f32.gmra.mrb[0].mxu0 %v329
        %v829 = vpop.f32.mrb[0].mxu0
        %v830 = vadd.f32 %v662, %v829
        %v831 = vpop.f32.mrb[0].mxu0
        %v832 = vadd.f32 %v666, %v831
        %833 = vmatprep.mubr.f32.mxu0 %v334
        %834 = vmatmul.mubr.f32.gmra.mrb[0].mxu0 %v333
        %v835 = vpop.f32.mrb[0].mxu0
        %v836 = vadd.f32 %v662, %v835
        %v837 = vpop.f32.mrb[0].mxu0
        %v838 = vadd.f32 %v666, %v837
        %839 = vmatprep.mubr.f32.mxu0 %v338
        %840 = vmatmul.mubr.f32.gmra.mrb[0].mxu0 %v337
        %v841 = vpop.f32.mrb[0].mxu0
        %v842 = vadd.f32 %v662, %v841
        %v843 = vpop.f32.mrb[0].mxu0
        %v844 = vadd.f32 %v666, %v843
        %845 = vmatprep.mubr.f32.mxu0 %v342
        %846 = vmatmul.mubr.f32.gmra.mrb[0].mxu0 %v341
        %v847 = vpop.f32.mrb[0].mxu0
        %v848 = vadd.f32 %v662, %v847
        %v849 = vpop.f32.mrb[0].mxu0
        %v850 = vadd.f32 %v666, %v849
        %851 = vmatprep.mubr.f32.mxu0 %v346
        %852 = vmatmul.mubr.f32.gmra.mrb[0].mxu0 %v345
        %v853 = vpop.f32.mrb[0].mxu0
        %v854 = vadd.f32 %v662, %v853
        %v855 = vpop.f32.mrb[0].mxu0
        %v856 = vadd.f32 %v666, %v855
        %857 = vmatprep.mubr.f32.mxu0 %v350
        %858 = vmatmul.mubr.f32.gmra.mrb[0].mxu0 %v349
        %v859 = vpop.f32.mrb[0].mxu0
        %v860 = vadd.f32 %v662, %v859
        %v861 = vpop.f32.mrb[0].mxu0
        %v862 = vadd.f32 %v666, %v861
        %863 = vmatprep.mubr.f32.mxu0 %v354
        %864 = vmatmul.mubr.f32.gmra.mrb[0].mxu0 %v353
        %v865 = vpop.f32.mrb[0].mxu0
        %v866 = vadd.f32 %v662, %v865
        %v867 = vpop.f32.mrb[0].mxu0
        %v868 = vadd.f32 %v666, %v867
        %869 = vmatprep.mubr.f32.mxu0 %v358
        %870 = vmatmul.mubr.f32.gmra.mrb[0].mxu0 %v357
        %v871 = vpop.f32.mrb[0].mxu0
        %v872 = vadd.f32 %v662, %v871
        %v873 = vpop.f32.mrb[0].mxu0
        %v874 = vadd.f32 %v666, %v873
        %875 = vmatprep.mubr.f32.mxu0 %v362
        %876 = vmatmul.mubr.f32.gmra.mrb[0].mxu0 %v361
        %v877 = vpop.f32.mrb[0].mxu0
        %v878 = vadd.f32 %v662, %v877
        %v879 = vpop.f32.mrb[0].mxu0
        %v880 = vadd.f32 %v666, %v879
        %881 = vmatprep.mubr.f32.mxu0 %v366
        %882 = vmatmul.mubr.f32.gmra.mrb[0].mxu0 %v365
        %v883 = vpop.f32.mrb[0].mxu0
        %v884 = vadd.f32 %v662, %v883
        %v885 = vpop.f32.mrb[0].mxu0
        %v886 = vadd.f32 %v666, %v885
        %887 = vmatprep.mubr.f32.mxu0 %v370
        %888 = vmatmul.mubr.f32.gmra.mrb[0].mxu0 %v369
        %v889 = vpop.f32.mrb[0].mxu0
        %v890 = vadd.f32 %v662, %v889
        %v891 = vpop.f32.mrb[0].mxu0
        %v892 = vadd.f32 %v666, %v891
        %893 = vmatprep.mubr.f32.mxu0 %v374
        %894 = vmatmul.mubr.f32.gmra.mrb[0].mxu0 %v373
        %v895 = vpop.f32.mrb[0].mxu0
        %v896 = vadd.f32 %v662, %v895
        %v897 = vpop.f32.mrb[0].mxu0
        %v898 = vadd.f32 %v666, %v897
        %899 = vmatprep.mubr.f32.mxu0 %v378
        %900 = vmatmul.mubr.f32.gmra.mrb[0].mxu0 %v377
        %v901 = vpop.f32.mrb[0].mxu0
        %v902 = vadd.f32 %v662, %v901
        %v903 = vpop.f32.mrb[0].mxu0
        %v904 = vadd.f32 %v666, %v903
        %905 = vmatprep.mubr.f32.mxu0 %v382
        %906 = vmatmul.mubr.f32.gmra.mrb[0].mxu0 %v381
        %v907 = vpop.f32.mrb[0].mxu0
        %v908 = vadd.f32 %v662, %v907
        %v909 = vpop.f32.mrb[0].mxu0
        %v910 = vadd.f32 %v666, %v909
        %911 = vmatprep.mubr.f32.mxu0 %v386
        %912 = vmatmul.mubr.f32.gmra.mrb[0].mxu0 %v385
        %v913 = vpop.f32.mrb[0].mxu0
        %v914 = vadd.f32 %v662, %v913
        %v915 = vpop.f32.mrb[0].mxu0
        %v916 = vadd.f32 %v666, %v915
        %917 = vmatprep.mubr.f32.mxu0 %v390
        %918 = vmatmul.mubr.f32.gmra.mrb[0].mxu0 %v389
        %v919 = vpop.f32.mrb[0].mxu0
        %v920 = vadd.f32 %v662, %v919
        %v921 = vpop.f32.mrb[0].mxu0
        %v922 = vadd.f32 %v666, %v921
        %923 = vmatprep.mubr.f32.mxu0 %v394
        %924 = vmatmul.mubr.f32.gmra.mrb[0].mxu0 %v393
        %v925 = vpop.f32.mrb[0].mxu0
        %v926 = vadd.f32 %v662, %v925
        %v927 = vpop.f32.mrb[0].mxu0
        %v928 = vadd.f32 %v666, %v927
        %929 = vmatprep.mubr.f32.mxu0 %v398
        %930 = vmatmul.mubr.f32.gmra.mrb[0].mxu0 %v397
        %v931 = vpop.f32.mrb[0].mxu0
        %v932 = vadd.f32 %v662, %v931
        %v933 = vpop.f32.mrb[0].mxu0
        %v934 = vadd.f32 %v666, %v933
        %935 = vdwg.mxu0
        %936 = vmatprep.subr.mxu0 %v530
        %937 = vmatpush1.msra.mxu0 %v529
        %938 = vmatprep.subr.mxu0 %v534
        %939 = vmatpush1.msra.mxu0 %v533
        %940 = vmatprep.subr.mxu0 %v538
        %941 = vmatpush1.msra.mxu0 %v537
        %942 = vmatprep.subr.mxu0 %v542
        %943 = vmatpush1.msra.mxu0 %v541
        %944 = vmatprep.subr.mxu0 %v546
        %945 = vmatpush1.msra.mxu0 %v545
        %946 = vmatprep.subr.mxu0 %v550
        %947 = vmatpush1.msra.mxu0 %v549
        %948 = vmatprep.subr.mxu0 %v554
        %949 = vmatpush1.msra.mxu0 %v553
        %950 = vmatprep.subr.mxu0 %v558
        %951 = vmatpush1.msra.mxu0 %v557
        %952 = vmatprep.subr.mxu0 %v562
        %953 = vmatpush1.msra.mxu0 %v561
        %954 = vmatprep.subr.mxu0 %v566
        %955 = vmatpush1.msra.mxu0 %v565
        %956 = vmatprep.subr.mxu0 %v570
        %957 = vmatpush1.msra.mxu0 %v569
        %958 = vmatprep.subr.mxu0 %v574
        %959 = vmatpush1.msra.mxu0 %v573
        %960 = vmatprep.subr.mxu0 %v578
        %961 = vmatpush1.msra.mxu0 %v577
        %962 = vmatprep.subr.mxu0 %v582
        %963 = vmatpush1.msra.mxu0 %v581
        %964 = vmatprep.subr.mxu0 %v586
        %965 = vmatpush1.msra.mxu0 %v585
        %966 = vmatprep.subr.mxu0 %v590
        %967 = vmatpush1.msra.mxu0 %v589
        %968 = vmatprep.subr.mxu0 %v594
        %969 = vmatpush1.msra.mxu0 %v593
        %970 = vmatprep.subr.mxu0 %v598
        %971 = vmatpush1.msra.mxu0 %v597
        %972 = vmatprep.subr.mxu0 %v602
        %973 = vmatpush1.msra.mxu0 %v601
        %974 = vmatprep.subr.mxu0 %v606
        %975 = vmatpush1.msra.mxu0 %v605
        %976 = vmatprep.subr.mxu0 %v610
        %977 = vmatpush1.msra.mxu0 %v609
        %978 = vmatprep.subr.mxu0 %v614
        %979 = vmatpush1.msra.mxu0 %v613
        %980 = vmatprep.subr.mxu0 %v618
        %981 = vmatpush1.msra.mxu0 %v617
        %982 = vmatprep.subr.mxu0 %v622
        %983 = vmatpush1.msra.mxu0 %v621
        %984 = vmatprep.subr.mxu0 %v626
        %985 = vmatpush1.msra.mxu0 %v625
        %986 = vmatprep.subr.mxu0 %v630
        %987 = vmatpush1.msra.mxu0 %v629
        %988 = vmatprep.subr.mxu0 %v634
        %989 = vmatpush1.msra.mxu0 %v633
        %990 = vmatprep.subr.mxu0 %v638
        %991 = vmatpush1.msra.mxu0 %v637
        %992 = vmatprep.subr.mxu0 %v642
        %993 = vmatpush1.msra.mxu0 %v641
        %994 = vmatprep.subr.mxu0 %v646
        %995 = vmatpush1.msra.mxu0 %v645
        %996 = vmatprep.subr.mxu0 %v650
        %997 = vmatpush1.msra.mxu0 %v649
        %998 = vmatprep.subr.mxu0 %v654
        %999 = vmatpush1.msra.mxu0 %v653
        %1000 = vmatprep.mubr.f32.mxu0 %v276
        %1001 = vmatmul.mubr.f32.gmra.mrb[0].mxu0 %v275
        %v1002 = vpop.f32.mrb[0].mxu0
        %v1003 = vadd.f32 %v746, %v1002
        %v1004 = vpop.f32.mrb[0].mxu0
        %v1005 = vadd.f32 %v748, %v1004
        %1006 = vmatprep.mubr.f32.mxu0 %v280
        %1007 = vmatmul.mubr.f32.gmra.mrb[0].mxu0 %v279
        %v1008 = vpop.f32.mrb[0].mxu0
        %v1009 = vadd.f32 %v752, %v1008
        %v1010 = vpop.f32.mrb[0].mxu0
        %v1011 = vadd.f32 %v754, %v1010
        %1012 = vmatprep.mubr.f32.mxu0 %v284
        %1013 = vmatmul.mubr.f32.gmra.mrb[0].mxu0 %v283
        %v1014 = vpop.f32.mrb[0].mxu0
        %v1015 = vadd.f32 %v758, %v1014
        %v1016 = vpop.f32.mrb[0].mxu0
        %v1017 = vadd.f32 %v760, %v1016
        %1018 = vmatprep.mubr.f32.mxu0 %v288
        %1019 = vmatmul.mubr.f32.gmra.mrb[0].mxu0 %v287
        %v1020 = vpop.f32.mrb[0].mxu0
        %v1021 = vadd.f32 %v764, %v1020
        %v1022 = vpop.f32.mrb[0].mxu0
        %v1023 = vadd.f32 %v766, %v1022
        %1024 = vmatprep.mubr.f32.mxu0 %v292
        %1025 = vmatmul.mubr.f32.gmra.mrb[0].mxu0 %v291
        %v1026 = vpop.f32.mrb[0].mxu0
        %v1027 = vadd.f32 %v770, %v1026
        %v1028 = vpop.f32.mrb[0].mxu0
        %v1029 = vadd.f32 %v772, %v1028
        %1030 = vmatprep.mubr.f32.mxu0 %v296
        %1031 = vmatmul.mubr.f32.gmra.mrb[0].mxu0 %v295
        %v1032 = vpop.f32.mrb[0].mxu0
        %v1033 = vadd.f32 %v776, %v1032
        %v1034 = vpop.f32.mrb[0].mxu0
        %v1035 = vadd.f32 %v778, %v1034
        %1036 = vmatprep.mubr.f32.mxu0 %v300
        %1037 = vmatmul.mubr.f32.gmra.mrb[0].mxu0 %v299
        %v1038 = vpop.f32.mrb[0].mxu0
        %v1039 = vadd.f32 %v782, %v1038
        %v1040 = vpop.f32.mrb[0].mxu0
        %v1041 = vadd.f32 %v784, %v1040
        %1042 = vmatprep.mubr.f32.mxu0 %v304
        %1043 = vmatmul.mubr.f32.gmra.mrb[0].mxu0 %v303
        %v1044 = vpop.f32.mrb[0].mxu0
        %v1045 = vadd.f32 %v788, %v1044
        %v1046 = vpop.f32.mrb[0].mxu0
        %v1047 = vadd.f32 %v790, %v1046
        %1048 = vmatprep.mubr.f32.mxu0 %v308
        %1049 = vmatmul.mubr.f32.gmra.mrb[0].mxu0 %v307
        %v1050 = vpop.f32.mrb[0].mxu0
        %v1051 = vadd.f32 %v794, %v1050
        %v1052 = vpop.f32.mrb[0].mxu0
        %v1053 = vadd.f32 %v796, %v1052
        %1054 = vmatprep.mubr.f32.mxu0 %v312
        %1055 = vmatmul.mubr.f32.gmra.mrb[0].mxu0 %v311
        %v1056 = vpop.f32.mrb[0].mxu0
        %v1057 = vadd.f32 %v800, %v1056
        %v1058 = vpop.f32.mrb[0].mxu0
        %v1059 = vadd.f32 %v802, %v1058
        %1060 = vmatprep.mubr.f32.mxu0 %v316
        %1061 = vmatmul.mubr.f32.gmra.mrb[0].mxu0 %v315
        %v1062 = vpop.f32.mrb[0].mxu0
        %v1063 = vadd.f32 %v806, %v1062
        %v1064 = vpop.f32.mrb[0].mxu0
        %v1065 = vadd.f32 %v808, %v1064
        %1066 = vmatprep.mubr.f32.mxu0 %v320
        %1067 = vmatmul.mubr.f32.gmra.mrb[0].mxu0 %v319
        %v1068 = vpop.f32.mrb[0].mxu0
        %v1069 = vadd.f32 %v812, %v1068
        %v1070 = vpop.f32.mrb[0].mxu0
        %v1071 = vadd.f32 %v814, %v1070
        %1072 = vmatprep.mubr.f32.mxu0 %v324
        %1073 = vmatmul.mubr.f32.gmra.mrb[0].mxu0 %v323
        %v1074 = vpop.f32.mrb[0].mxu0
        %v1075 = vadd.f32 %v818, %v1074
        %v1076 = vpop.f32.mrb[0].mxu0
        %v1077 = vadd.f32 %v820, %v1076
        %1078 = vmatprep.mubr.f32.mxu0 %v328
        %1079 = vmatmul.mubr.f32.gmra.mrb[0].mxu0 %v327
        %v1080 = vpop.f32.mrb[0].mxu0
        %v1081 = vadd.f32 %v824, %v1080
        %v1082 = vpop.f32.mrb[0].mxu0
        %v1083 = vadd.f32 %v826, %v1082
        %1084 = vmatprep.mubr.f32.mxu0 %v332
        %1085 = vmatmul.mubr.f32.gmra.mrb[0].mxu0 %v331
        %v1086 = vpop.f32.mrb[0].mxu0
        %v1087 = vadd.f32 %v830, %v1086
        %v1088 = vpop.f32.mrb[0].mxu0
        %v1089 = vadd.f32 %v832, %v1088
        %1090 = vmatprep.mubr.f32.mxu0 %v336
        %1091 = vmatmul.mubr.f32.gmra.mrb[0].mxu0 %v335
        %v1092 = vpop.f32.mrb[0].mxu0
        %v1093 = vadd.f32 %v836, %v1092
        %v1094 = vpop.f32.mrb[0].mxu0
        %v1095 = vadd.f32 %v838, %v1094
        %1096 = vmatprep.mubr.f32.mxu0 %v340
        %1097 = vmatmul.mubr.f32.gmra.mrb[0].mxu0 %v339
        %v1098 = vpop.f32.mrb[0].mxu0
        %v1099 = vadd.f32 %v842, %v1098
        %v1100 = vpop.f32.mrb[0].mxu0
        %v1101 = vadd.f32 %v844, %v1100
        %1102 = vmatprep.mubr.f32.mxu0 %v344
        %1103 = vmatmul.mubr.f32.gmra.mrb[0].mxu0 %v343
        %v1104 = vpop.f32.mrb[0].mxu0
        %v1105 = vadd.f32 %v848, %v1104
        %v1106 = vpop.f32.mrb[0].mxu0
        %v1107 = vadd.f32 %v850, %v1106
        %1108 = vmatprep.mubr.f32.mxu0 %v348
        %1109 = vmatmul.mubr.f32.gmra.mrb[0].mxu0 %v347
        %v1110 = vpop.f32.mrb[0].mxu0
        %v1111 = vadd.f32 %v854, %v1110
        %v1112 = vpop.f32.mrb[0].mxu0
        %v1113 = vadd.f32 %v856, %v1112
        %1114 = vmatprep.mubr.f32.mxu0 %v352
        %1115 = vmatmul.mubr.f32.gmra.mrb[0].mxu0 %v351
        %v1116 = vpop.f32.mrb[0].mxu0
        %v1117 = vadd.f32 %v860, %v1116
        %v1118 = vpop.f32.mrb[0].mxu0
        %v1119 = vadd.f32 %v862, %v1118
        %1120 = vmatprep.mubr.f32.mxu0 %v356
        %1121 = vmatmul.mubr.f32.gmra.mrb[0].mxu0 %v355
        %v1122 = vpop.f32.mrb[0].mxu0
        %v1123 = vadd.f32 %v866, %v1122
        %v1124 = vpop.f32.mrb[0].mxu0
        %v1125 = vadd.f32 %v868, %v1124
        %1126 = vmatprep.mubr.f32.mxu0 %v360
        %1127 = vmatmul.mubr.f32.gmra.mrb[0].mxu0 %v359
        %v1128 = vpop.f32.mrb[0].mxu0
        %v1129 = vadd.f32 %v872, %v1128
        %v1130 = vpop.f32.mrb[0].mxu0
        %v1131 = vadd.f32 %v874, %v1130
        %1132 = vmatprep.mubr.f32.mxu0 %v364
        %1133 = vmatmul.mubr.f32.gmra.mrb[0].mxu0 %v363
        %v1134 = vpop.f32.mrb[0].mxu0
        %v1135 = vadd.f32 %v878, %v1134
        %v1136 = vpop.f32.mrb[0].mxu0
        %v1137 = vadd.f32 %v880, %v1136
        %1138 = vmatprep.mubr.f32.mxu0 %v368
        %1139 = vmatmul.mubr.f32.gmra.mrb[0].mxu0 %v367
        %v1140 = vpop.f32.mrb[0].mxu0
        %v1141 = vadd.f32 %v884, %v1140
        %v1142 = vpop.f32.mrb[0].mxu0
        %v1143 = vadd.f32 %v886, %v1142
        %1144 = vmatprep.mubr.f32.mxu0 %v372
        %1145 = vmatmul.mubr.f32.gmra.mrb[0].mxu0 %v371
        %v1146 = vpop.f32.mrb[0].mxu0
        %v1147 = vadd.f32 %v890, %v1146
        %v1148 = vpop.f32.mrb[0].mxu0
        %v1149 = vadd.f32 %v892, %v1148
        %1150 = vmatprep.mubr.f32.mxu0 %v376
        %1151 = vmatmul.mubr.f32.gmra.mrb[0].mxu0 %v375
        %v1152 = vpop.f32.mrb[0].mxu0
        %v1153 = vadd.f32 %v896, %v1152
        %v1154 = vpop.f32.mrb[0].mxu0
        %v1155 = vadd.f32 %v898, %v1154
        %1156 = vmatprep.mubr.f32.mxu0 %v380
        %1157 = vmatmul.mubr.f32.gmra.mrb[0].mxu0 %v379
        %v1158 = vpop.f32.mrb[0].mxu0
        %v1159 = vadd.f32 %v902, %v1158
        %v1160 = vpop.f32.mrb[0].mxu0
        %v1161 = vadd.f32 %v904, %v1160
        %1162 = vmatprep.mubr.f32.mxu0 %v384
        %1163 = vmatmul.mubr.f32.gmra.mrb[0].mxu0 %v383
        %v1164 = vpop.f32.mrb[0].mxu0
        %v1165 = vadd.f32 %v908, %v1164
        %v1166 = vpop.f32.mrb[0].mxu0
        %v1167 = vadd.f32 %v910, %v1166
        %1168 = vmatprep.mubr.f32.mxu0 %v388
        %1169 = vmatmul.mubr.f32.gmra.mrb[0].mxu0 %v387
        %v1170 = vpop.f32.mrb[0].mxu0
        %v1171 = vadd.f32 %v914, %v1170
        %v1172 = vpop.f32.mrb[0].mxu0
        %v1173 = vadd.f32 %v916, %v1172
        %1174 = vmatprep.mubr.f32.mxu0 %v392
        %1175 = vmatmul.mubr.f32.gmra.mrb[0].mxu0 %v391
        %v1176 = vpop.f32.mrb[0].mxu0
        %v1177 = vadd.f32 %v920, %v1176
        %v1178 = vpop.f32.mrb[0].mxu0
        %v1179 = vadd.f32 %v922, %v1178
        %1180 = vmatprep.mubr.f32.mxu0 %v396
        %1181 = vmatmul.mubr.f32.gmra.mrb[0].mxu0 %v395
        %v1182 = vpop.f32.mrb[0].mxu0
        %v1183 = vadd.f32 %v926, %v1182
        %v1184 = vpop.f32.mrb[0].mxu0
        %v1185 = vadd.f32 %v928, %v1184
        %1186 = vmatprep.mubr.f32.mxu0 %v400
        %1187 = vmatmul.mubr.f32.gmra.mrb[0].mxu0 %v399
        %v1188 = vpop.f32.mrb[0].mxu0
        %v1189 = vadd.f32 %v932, %v1188
        %v1190 = vpop.f32.mrb[0].mxu0
        %v1191 = vadd.f32 %v934, %v1190
        %1192 = vdwg.mxu0
        %1193 = vmatprep.subr.mxu0 %v404
        %1194 = vmatpush1.msra.mxu0 %v403
        %1195 = vmatprep.subr.mxu0 %v408
        %1196 = vmatpush1.msra.mxu0 %v407
        %1197 = vmatprep.subr.mxu0 %v412
        %1198 = vmatpush1.msra.mxu0 %v411
        %1199 = vmatprep.subr.mxu0 %v416
        %1200 = vmatpush1.msra.mxu0 %v415
        %1201 = vmatprep.subr.mxu0 %v420
        %1202 = vmatpush1.msra.mxu0 %v419
        %1203 = vmatprep.subr.mxu0 %v424
        %1204 = vmatpush1.msra.mxu0 %v423
        %1205 = vmatprep.subr.mxu0 %v428
        %1206 = vmatpush1.msra.mxu0 %v427
        %1207 = vmatprep.subr.mxu0 %v432
        %1208 = vmatpush1.msra.mxu0 %v431
        %1209 = vmatprep.subr.mxu0 %v436
        %1210 = vmatpush1.msra.mxu0 %v435
        %1211 = vmatprep.subr.mxu0 %v440
        %1212 = vmatpush1.msra.mxu0 %v439
        %1213 = vmatprep.subr.mxu0 %v444
        %1214 = vmatpush1.msra.mxu0 %v443
        %1215 = vmatprep.subr.mxu0 %v448
        %1216 = vmatpush1.msra.mxu0 %v447
        %1217 = vmatprep.subr.mxu0 %v452
        %1218 = vmatpush1.msra.mxu0 %v451
        %1219 = vmatprep.subr.mxu0 %v456
        %1220 = vmatpush1.msra.mxu0 %v455
        %1221 = vmatprep.subr.mxu0 %v460
        %1222 = vmatpush1.msra.mxu0 %v459
        %1223 = vmatprep.subr.mxu0 %v464
        %1224 = vmatpush1.msra.mxu0 %v463
        %1225 = vmatprep.subr.mxu0 %v468
        %1226 = vmatpush1.msra.mxu0 %v467
        %1227 = vmatprep.subr.mxu0 %v472
        %1228 = vmatpush1.msra.mxu0 %v471
        %1229 = vmatprep.subr.mxu0 %v476
        %1230 = vmatpush1.msra.mxu0 %v475
        %1231 = vmatprep.subr.mxu0 %v480
        %1232 = vmatpush1.msra.mxu0 %v479
        %1233 = vmatprep.subr.mxu0 %v484
        %1234 = vmatpush1.msra.mxu0 %v483
        %1235 = vmatprep.subr.mxu0 %v488
        %1236 = vmatpush1.msra.mxu0 %v487
        %1237 = vmatprep.subr.mxu0 %v492
        %1238 = vmatpush1.msra.mxu0 %v491
        %1239 = vmatprep.subr.mxu0 %v496
        %1240 = vmatpush1.msra.mxu0 %v495
        %1241 = vmatprep.subr.mxu0 %v500
        %1242 = vmatpush1.msra.mxu0 %v499
        %1243 = vmatprep.subr.mxu0 %v504
        %1244 = vmatpush1.msra.mxu0 %v503
        %1245 = vmatprep.subr.mxu0 %v508
        %1246 = vmatpush1.msra.mxu0 %v507
        %1247 = vmatprep.subr.mxu0 %v512
        %1248 = vmatpush1.msra.mxu0 %v511
        %1249 = vmatprep.subr.mxu0 %v516
        %1250 = vmatpush1.msra.mxu0 %v515
        %1251 = vmatprep.subr.mxu0 %v520
        %1252 = vmatpush1.msra.mxu0 %v519
        %1253 = vmatprep.subr.mxu0 %v524
        %1254 = vmatpush1.msra.mxu0 %v523
        %1255 = vmatprep.subr.mxu0 %v528
        %1256 = vmatpush1.msra.mxu0 %v527
        %1257 = vmatprep.mubr.f32.mxu0 %v274
        %1258 = vmatmul.mubr.f32.gmra.mrb[0].mxu0 %v273
        %v1259 = vpop.f32.mrb[0].mxu0
        %v1260 = vadd.f32 %v670, %v1259
        %v1261 = vpop.f32.mrb[0].mxu0
        %v1262 = vadd.f32 %v674, %v1261
        %1263 = vmatprep.mubr.f32.mxu0 %v278
        %1264 = vmatmul.mubr.f32.gmra.mrb[0].mxu0 %v277
        %v1265 = vpop.f32.mrb[0].mxu0
        %v1266 = vadd.f32 %v670, %v1265
        %v1267 = vpop.f32.mrb[0].mxu0
        %v1268 = vadd.f32 %v674, %v1267
        %1269 = vmatprep.mubr.f32.mxu0 %v282
        %1270 = vmatmul.mubr.f32.gmra.mrb[0].mxu0 %v281
        %v1271 = vpop.f32.mrb[0].mxu0
        %v1272 = vadd.f32 %v670, %v1271
        %v1273 = vpop.f32.mrb[0].mxu0
        %v1274 = vadd.f32 %v674, %v1273
        %1275 = vmatprep.mubr.f32.mxu0 %v286
        %1276 = vmatmul.mubr.f32.gmra.mrb[0].mxu0 %v285
        %v1277 = vpop.f32.mrb[0].mxu0
        %v1278 = vadd.f32 %v670, %v1277
        %v1279 = vpop.f32.mrb[0].mxu0
        %v1280 = vadd.f32 %v674, %v1279
        %1281 = vmatprep.mubr.f32.mxu0 %v290
        %1282 = vmatmul.mubr.f32.gmra.mrb[0].mxu0 %v289
        %v1283 = vpop.f32.mrb[0].mxu0
        %v1284 = vadd.f32 %v670, %v1283
        %v1285 = vpop.f32.mrb[0].mxu0
        %v1286 = vadd.f32 %v674, %v1285
        %1287 = vmatprep.mubr.f32.mxu0 %v294
        %1288 = vmatmul.mubr.f32.gmra.mrb[0].mxu0 %v293
        %v1289 = vpop.f32.mrb[0].mxu0
        %v1290 = vadd.f32 %v670, %v1289
        %v1291 = vpop.f32.mrb[0].mxu0
        %v1292 = vadd.f32 %v674, %v1291
        %1293 = vmatprep.mubr.f32.mxu0 %v298
        %1294 = vmatmul.mubr.f32.gmra.mrb[0].mxu0 %v297
        %v1295 = vpop.f32.mrb[0].mxu0
        %v1296 = vadd.f32 %v670, %v1295
        %v1297 = vpop.f32.mrb[0].mxu0
        %v1298 = vadd.f32 %v674, %v1297
        %1299 = vmatprep.mubr.f32.mxu0 %v302
        %1300 = vmatmul.mubr.f32.gmra.mrb[0].mxu0 %v301
        %v1301 = vpop.f32.mrb[0].mxu0
        %v1302 = vadd.f32 %v670, %v1301
        %v1303 = vpop.f32.mrb[0].mxu0
        %v1304 = vadd.f32 %v674, %v1303
        %1305 = vmatprep.mubr.f32.mxu0 %v306
        %1306 = vmatmul.mubr.f32.gmra.mrb[0].mxu0 %v305
        %v1307 = vpop.f32.mrb[0].mxu0
        %v1308 = vadd.f32 %v670, %v1307
        %v1309 = vpop.f32.mrb[0].mxu0
        %v1310 = vadd.f32 %v674, %v1309
        %1311 = vmatprep.mubr.f32.mxu0 %v310
        %1312 = vmatmul.mubr.f32.gmra.mrb[0].mxu0 %v309
        %v1313 = vpop.f32.mrb[0].mxu0
        %v1314 = vadd.f32 %v670, %v1313
        %v1315 = vpop.f32.mrb[0].mxu0
        %v1316 = vadd.f32 %v674, %v1315
        %1317 = vmatprep.mubr.f32.mxu0 %v314
        %1318 = vmatmul.mubr.f32.gmra.mrb[0].mxu0 %v313
        %v1319 = vpop.f32.mrb[0].mxu0
        %v1320 = vadd.f32 %v670, %v1319
        %v1321 = vpop.f32.mrb[0].mxu0
        %v1322 = vadd.f32 %v674, %v1321
        %1323 = vmatprep.mubr.f32.mxu0 %v318
        %1324 = vmatmul.mubr.f32.gmra.mrb[0].mxu0 %v317
        %v1325 = vpop.f32.mrb[0].mxu0
        %v1326 = vadd.f32 %v670, %v1325
        %v1327 = vpop.f32.mrb[0].mxu0
        %v1328 = vadd.f32 %v674, %v1327
        %1329 = vmatprep.mubr.f32.mxu0 %v322
        %1330 = vmatmul.mubr.f32.gmra.mrb[0].mxu0 %v321
        %v1331 = vpop.f32.mrb[0].mxu0
        %v1332 = vadd.f32 %v670, %v1331
        %v1333 = vpop.f32.mrb[0].mxu0
        %v1334 = vadd.f32 %v674, %v1333
        %1335 = vmatprep.mubr.f32.mxu0 %v326
        %1336 = vmatmul.mubr.f32.gmra.mrb[0].mxu0 %v325
        %v1337 = vpop.f32.mrb[0].mxu0
        %v1338 = vadd.f32 %v670, %v1337
        %v1339 = vpop.f32.mrb[0].mxu0
        %v1340 = vadd.f32 %v674, %v1339
        %1341 = vmatprep.mubr.f32.mxu0 %v330
        %1342 = vmatmul.mubr.f32.gmra.mrb[0].mxu0 %v329
        %v1343 = vpop.f32.mrb[0].mxu0
        %v1344 = vadd.f32 %v670, %v1343
        %v1345 = vpop.f32.mrb[0].mxu0
        %v1346 = vadd.f32 %v674, %v1345
        %1347 = vmatprep.mubr.f32.mxu0 %v334
        %1348 = vmatmul.mubr.f32.gmra.mrb[0].mxu0 %v333
        %v1349 = vpop.f32.mrb[0].mxu0
        %v1350 = vadd.f32 %v670, %v1349
        %v1351 = vpop.f32.mrb[0].mxu0
        %v1352 = vadd.f32 %v674, %v1351
        %1353 = vmatprep.mubr.f32.mxu0 %v338
        %1354 = vmatmul.mubr.f32.gmra.mrb[0].mxu0 %v337
        %v1355 = vpop.f32.mrb[0].mxu0
        %v1356 = vadd.f32 %v670, %v1355
        %v1357 = vpop.f32.mrb[0].mxu0
        %v1358 = vadd.f32 %v674, %v1357
        %1359 = vmatprep.mubr.f32.mxu0 %v342
        %1360 = vmatmul.mubr.f32.gmra.mrb[0].mxu0 %v341
        %v1361 = vpop.f32.mrb[0].mxu0
        %v1362 = vadd.f32 %v670, %v1361
        %v1363 = vpop.f32.mrb[0].mxu0
        %v1364 = vadd.f32 %v674, %v1363
        %1365 = vmatprep.mubr.f32.mxu0 %v346
        %1366 = vmatmul.mubr.f32.gmra.mrb[0].mxu0 %v345
        %v1367 = vpop.f32.mrb[0].mxu0
        %v1368 = vadd.f32 %v670, %v1367
        %v1369 = vpop.f32.mrb[0].mxu0
        %v1370 = vadd.f32 %v674, %v1369
        %1371 = vmatprep.mubr.f32.mxu0 %v350
        %1372 = vmatmul.mubr.f32.gmra.mrb[0].mxu0 %v349
        %v1373 = vpop.f32.mrb[0].mxu0
        %v1374 = vadd.f32 %v670, %v1373
        %v1375 = vpop.f32.mrb[0].mxu0
        %v1376 = vadd.f32 %v674, %v1375
        %1377 = vmatprep.mubr.f32.mxu0 %v354
        %1378 = vmatmul.mubr.f32.gmra.mrb[0].mxu0 %v353
        %v1379 = vpop.f32.mrb[0].mxu0
        %v1380 = vadd.f32 %v670, %v1379
        %v1381 = vpop.f32.mrb[0].mxu0
        %v1382 = vadd.f32 %v674, %v1381
        %1383 = vmatprep.mubr.f32.mxu0 %v358
        %1384 = vmatmul.mubr.f32.gmra.mrb[0].mxu0 %v357
        %v1385 = vpop.f32.mrb[0].mxu0
        %v1386 = vadd.f32 %v670, %v1385
        %v1387 = vpop.f32.mrb[0].mxu0
        %v1388 = vadd.f32 %v674, %v1387
        %1389 = vmatprep.mubr.f32.mxu0 %v362
        %1390 = vmatmul.mubr.f32.gmra.mrb[0].mxu0 %v361
        %v1391 = vpop.f32.mrb[0].mxu0
        %v1392 = vadd.f32 %v670, %v1391
        %v1393 = vpop.f32.mrb[0].mxu0
        %v1394 = vadd.f32 %v674, %v1393
        %1395 = vmatprep.mubr.f32.mxu0 %v366
        %1396 = vmatmul.mubr.f32.gmra.mrb[0].mxu0 %v365
        %v1397 = vpop.f32.mrb[0].mxu0
        %v1398 = vadd.f32 %v670, %v1397
        %v1399 = vpop.f32.mrb[0].mxu0
        %v1400 = vadd.f32 %v674, %v1399
        %1401 = vmatprep.mubr.f32.mxu0 %v370
        %1402 = vmatmul.mubr.f32.gmra.mrb[0].mxu0 %v369
        %v1403 = vpop.f32.mrb[0].mxu0
        %v1404 = vadd.f32 %v670, %v1403
        %v1405 = vpop.f32.mrb[0].mxu0
        %v1406 = vadd.f32 %v674, %v1405
        %1407 = vmatprep.mubr.f32.mxu0 %v374
        %1408 = vmatmul.mubr.f32.gmra.mrb[0].mxu0 %v373
        %v1409 = vpop.f32.mrb[0].mxu0
        %v1410 = vadd.f32 %v670, %v1409
        %v1411 = vpop.f32.mrb[0].mxu0
        %v1412 = vadd.f32 %v674, %v1411
        %1413 = vmatprep.mubr.f32.mxu0 %v378
        %1414 = vmatmul.mubr.f32.gmra.mrb[0].mxu0 %v377
        %v1415 = vpop.f32.mrb[0].mxu0
        %v1416 = vadd.f32 %v670, %v1415
        %v1417 = vpop.f32.mrb[0].mxu0
        %v1418 = vadd.f32 %v674, %v1417
        %1419 = vmatprep.mubr.f32.mxu0 %v382
        %1420 = vmatmul.mubr.f32.gmra.mrb[0].mxu0 %v381
        %v1421 = vpop.f32.mrb[0].mxu0
        %v1422 = vadd.f32 %v670, %v1421
        %v1423 = vpop.f32.mrb[0].mxu0
        %v1424 = vadd.f32 %v674, %v1423
        %1425 = vmatprep.mubr.f32.mxu0 %v386
        %1426 = vmatmul.mubr.f32.gmra.mrb[0].mxu0 %v385
        %v1427 = vpop.f32.mrb[0].mxu0
        %v1428 = vadd.f32 %v670, %v1427
        %v1429 = vpop.f32.mrb[0].mxu0
        %v1430 = vadd.f32 %v674, %v1429
        %1431 = vmatprep.mubr.f32.mxu0 %v390
        %1432 = vmatmul.mubr.f32.gmra.mrb[0].mxu0 %v389
        %v1433 = vpop.f32.mrb[0].mxu0
        %v1434 = vadd.f32 %v670, %v1433
        %v1435 = vpop.f32.mrb[0].mxu0
        %v1436 = vadd.f32 %v674, %v1435
        %1437 = vmatprep.mubr.f32.mxu0 %v394
        %1438 = vmatmul.mubr.f32.gmra.mrb[0].mxu0 %v393
        %v1439 = vpop.f32.mrb[0].mxu0
        %v1440 = vadd.f32 %v670, %v1439
        %v1441 = vpop.f32.mrb[0].mxu0
        %v1442 = vadd.f32 %v674, %v1441
        %1443 = vmatprep.mubr.f32.mxu0 %v398
        %1444 = vmatmul.mubr.f32.gmra.mrb[0].mxu0 %v397
        %v1445 = vpop.f32.mrb[0].mxu0
        %v1446 = vadd.f32 %v670, %v1445
        %v1447 = vpop.f32.mrb[0].mxu0
        %v1448 = vadd.f32 %v674, %v1447
        %1449 = vdwg.mxu0
        %1450 = vmatprep.subr.mxu0 %v532
        %1451 = vmatpush1.msra.mxu0 %v531
        %1452 = vmatprep.subr.mxu0 %v536
        %1453 = vmatpush1.msra.mxu0 %v535
        %1454 = vmatprep.subr.mxu0 %v540
        %1455 = vmatpush1.msra.mxu0 %v539
        %1456 = vmatprep.subr.mxu0 %v544
        %1457 = vmatpush1.msra.mxu0 %v543
        %1458 = vmatprep.subr.mxu0 %v548
        %1459 = vmatpush1.msra.mxu0 %v547
        %1460 = vmatprep.subr.mxu0 %v552
        %1461 = vmatpush1.msra.mxu0 %v551
        %1462 = vmatprep.subr.mxu0 %v556
        %1463 = vmatpush1.msra.mxu0 %v555
        %1464 = vmatprep.subr.mxu0 %v560
        %1465 = vmatpush1.msra.mxu0 %v559
        %1466 = vmatprep.subr.mxu0 %v564
        %1467 = vmatpush1.msra.mxu0 %v563
        %1468 = vmatprep.subr.mxu0 %v568
        %1469 = vmatpush1.msra.mxu0 %v567
        %1470 = vmatprep.subr.mxu0 %v572
        %1471 = vmatpush1.msra.mxu0 %v571
        %1472 = vmatprep.subr.mxu0 %v576
        %1473 = vmatpush1.msra.mxu0 %v575
        %1474 = vmatprep.subr.mxu0 %v580
        %1475 = vmatpush1.msra.mxu0 %v579
        %1476 = vmatprep.subr.mxu0 %v584
        %1477 = vmatpush1.msra.mxu0 %v583
        %1478 = vmatprep.subr.mxu0 %v588
        %1479 = vmatpush1.msra.mxu0 %v587
        %1480 = vmatprep.subr.mxu0 %v592
        %1481 = vmatpush1.msra.mxu0 %v591
        %1482 = vmatprep.subr.mxu0 %v596
        %1483 = vmatpush1.msra.mxu0 %v595
        %1484 = vmatprep.subr.mxu0 %v600
        %1485 = vmatpush1.msra.mxu0 %v599
        %1486 = vmatprep.subr.mxu0 %v604
        %1487 = vmatpush1.msra.mxu0 %v603
        %1488 = vmatprep.subr.mxu0 %v608
        %1489 = vmatpush1.msra.mxu0 %v607
        %1490 = vmatprep.subr.mxu0 %v612
        %1491 = vmatpush1.msra.mxu0 %v611
        %1492 = vmatprep.subr.mxu0 %v616
        %1493 = vmatpush1.msra.mxu0 %v615
        %1494 = vmatprep.subr.mxu0 %v620
        %1495 = vmatpush1.msra.mxu0 %v619
        %1496 = vmatprep.subr.mxu0 %v624
        %1497 = vmatpush1.msra.mxu0 %v623
        %1498 = vmatprep.subr.mxu0 %v628
        %1499 = vmatpush1.msra.mxu0 %v627
        %1500 = vmatprep.subr.mxu0 %v632
        %1501 = vmatpush1.msra.mxu0 %v631
        %1502 = vmatprep.subr.mxu0 %v636
        %1503 = vmatpush1.msra.mxu0 %v635
        %1504 = vmatprep.subr.mxu0 %v640
        %1505 = vmatpush1.msra.mxu0 %v639
        %1506 = vmatprep.subr.mxu0 %v644
        %1507 = vmatpush1.msra.mxu0 %v643
        %1508 = vmatprep.subr.mxu0 %v648
        %1509 = vmatpush1.msra.mxu0 %v647
        %1510 = vmatprep.subr.mxu0 %v652
        %1511 = vmatpush1.msra.mxu0 %v651
        %1512 = vmatprep.subr.mxu0 %v656
        %1513 = vmatpush1.msra.mxu0 %v655
        %1514 = vmatprep.mubr.f32.mxu0 %v276
        %1515 = vmatmul.mubr.f32.gmra.mrb[0].mxu0 %v275
        %v1516 = vpop.f32.mrb[0].mxu0
        %v1517 = vadd.f32 %v1260, %v1516
        %v1518 = vpop.f32.mrb[0].mxu0
        %v1519 = vadd.f32 %v1262, %v1518
        %1520 = vmatprep.mubr.f32.mxu0 %v280
        %1521 = vmatmul.mubr.f32.gmra.mrb[0].mxu0 %v279
        %v1522 = vpop.f32.mrb[0].mxu0
        %v1523 = vadd.f32 %v1266, %v1522
        %v1524 = vpop.f32.mrb[0].mxu0
        %v1525 = vadd.f32 %v1268, %v1524
        %1526 = vmatprep.mubr.f32.mxu0 %v284
        %1527 = vmatmul.mubr.f32.gmra.mrb[0].mxu0 %v283
        %v1528 = vpop.f32.mrb[0].mxu0
        %v1529 = vadd.f32 %v1272, %v1528
        %v1530 = vpop.f32.mrb[0].mxu0
        %v1531 = vadd.f32 %v1274, %v1530
        %1532 = vmatprep.mubr.f32.mxu0 %v288
        %1533 = vmatmul.mubr.f32.gmra.mrb[0].mxu0 %v287
        %v1534 = vpop.f32.mrb[0].mxu0
        %v1535 = vadd.f32 %v1278, %v1534
        %v1536 = vpop.f32.mrb[0].mxu0
        %v1537 = vadd.f32 %v1280, %v1536
        %1538 = vmatprep.mubr.f32.mxu0 %v292
        %1539 = vmatmul.mubr.f32.gmra.mrb[0].mxu0 %v291
        %v1540 = vpop.f32.mrb[0].mxu0
        %v1541 = vadd.f32 %v1284, %v1540
        %v1542 = vpop.f32.mrb[0].mxu0
        %v1543 = vadd.f32 %v1286, %v1542
        %1544 = vmatprep.mubr.f32.mxu0 %v296
        %1545 = vmatmul.mubr.f32.gmra.mrb[0].mxu0 %v295
        %v1546 = vpop.f32.mrb[0].mxu0
        %v1547 = vadd.f32 %v1290, %v1546
        %v1548 = vpop.f32.mrb[0].mxu0
        %v1549 = vadd.f32 %v1292, %v1548
        %1550 = vmatprep.mubr.f32.mxu0 %v300
        %1551 = vmatmul.mubr.f32.gmra.mrb[0].mxu0 %v299
        %v1552 = vpop.f32.mrb[0].mxu0
        %v1553 = vadd.f32 %v1296, %v1552
        %v1554 = vpop.f32.mrb[0].mxu0
        %v1555 = vadd.f32 %v1298, %v1554
        %1556 = vmatprep.mubr.f32.mxu0 %v304
        %1557 = vmatmul.mubr.f32.gmra.mrb[0].mxu0 %v303
        %v1558 = vpop.f32.mrb[0].mxu0
        %v1559 = vadd.f32 %v1302, %v1558
        %v1560 = vpop.f32.mrb[0].mxu0
        %v1561 = vadd.f32 %v1304, %v1560
        %1562 = vmatprep.mubr.f32.mxu0 %v308
        %1563 = vmatmul.mubr.f32.gmra.mrb[0].mxu0 %v307
        %v1564 = vpop.f32.mrb[0].mxu0
        %v1565 = vadd.f32 %v1308, %v1564
        %v1566 = vpop.f32.mrb[0].mxu0
        %v1567 = vadd.f32 %v1310, %v1566
        %1568 = vmatprep.mubr.f32.mxu0 %v312
        %1569 = vmatmul.mubr.f32.gmra.mrb[0].mxu0 %v311
        %v1570 = vpop.f32.mrb[0].mxu0
        %v1571 = vadd.f32 %v1314, %v1570
        %v1572 = vpop.f32.mrb[0].mxu0
        %v1573 = vadd.f32 %v1316, %v1572
        %1574 = vmatprep.mubr.f32.mxu0 %v316
        %1575 = vmatmul.mubr.f32.gmra.mrb[0].mxu0 %v315
        %v1576 = vpop.f32.mrb[0].mxu0
        %v1577 = vadd.f32 %v1320, %v1576
        %v1578 = vpop.f32.mrb[0].mxu0
        %v1579 = vadd.f32 %v1322, %v1578
        %1580 = vmatprep.mubr.f32.mxu0 %v320
        %1581 = vmatmul.mubr.f32.gmra.mrb[0].mxu0 %v319
        %v1582 = vpop.f32.mrb[0].mxu0
        %v1583 = vadd.f32 %v1326, %v1582
        %v1584 = vpop.f32.mrb[0].mxu0
        %v1585 = vadd.f32 %v1328, %v1584
        %1586 = vmatprep.mubr.f32.mxu0 %v324
        %1587 = vmatmul.mubr.f32.gmra.mrb[0].mxu0 %v323
        %v1588 = vpop.f32.mrb[0].mxu0
        %v1589 = vadd.f32 %v1332, %v1588
        %v1590 = vpop.f32.mrb[0].mxu0
        %v1591 = vadd.f32 %v1334, %v1590
        %1592 = vmatprep.mubr.f32.mxu0 %v328
        %1593 = vmatmul.mubr.f32.gmra.mrb[0].mxu0 %v327
        %v1594 = vpop.f32.mrb[0].mxu0
        %v1595 = vadd.f32 %v1338, %v1594
        %v1596 = vpop.f32.mrb[0].mxu0
        %v1597 = vadd.f32 %v1340, %v1596
        %1598 = vmatprep.mubr.f32.mxu0 %v332
        %1599 = vmatmul.mubr.f32.gmra.mrb[0].mxu0 %v331
        %v1600 = vpop.f32.mrb[0].mxu0
        %v1601 = vadd.f32 %v1344, %v1600
        %v1602 = vpop.f32.mrb[0].mxu0
        %v1603 = vadd.f32 %v1346, %v1602
        %1604 = vmatprep.mubr.f32.mxu0 %v336
        %1605 = vmatmul.mubr.f32.gmra.mrb[0].mxu0 %v335
        %v1606 = vpop.f32.mrb[0].mxu0
        %v1607 = vadd.f32 %v1350, %v1606
        %v1608 = vpop.f32.mrb[0].mxu0
        %v1609 = vadd.f32 %v1352, %v1608
        %1610 = vmatprep.mubr.f32.mxu0 %v340
        %1611 = vmatmul.mubr.f32.gmra.mrb[0].mxu0 %v339
        %v1612 = vpop.f32.mrb[0].mxu0
        %v1613 = vadd.f32 %v1356, %v1612
        %v1614 = vpop.f32.mrb[0].mxu0
        %v1615 = vadd.f32 %v1358, %v1614
        %1616 = vmatprep.mubr.f32.mxu0 %v344
        %1617 = vmatmul.mubr.f32.gmra.mrb[0].mxu0 %v343
        %v1618 = vpop.f32.mrb[0].mxu0
        %v1619 = vadd.f32 %v1362, %v1618
        %v1620 = vpop.f32.mrb[0].mxu0
        %v1621 = vadd.f32 %v1364, %v1620
        %1622 = vmatprep.mubr.f32.mxu0 %v348
        %1623 = vmatmul.mubr.f32.gmra.mrb[0].mxu0 %v347
        %v1624 = vpop.f32.mrb[0].mxu0
        %v1625 = vadd.f32 %v1368, %v1624
        %v1626 = vpop.f32.mrb[0].mxu0
        %v1627 = vadd.f32 %v1370, %v1626
        %1628 = vmatprep.mubr.f32.mxu0 %v352
        %1629 = vmatmul.mubr.f32.gmra.mrb[0].mxu0 %v351
        %v1630 = vpop.f32.mrb[0].mxu0
        %v1631 = vadd.f32 %v1374, %v1630
        %v1632 = vpop.f32.mrb[0].mxu0
        %v1633 = vadd.f32 %v1376, %v1632
        %1634 = vmatprep.mubr.f32.mxu0 %v356
        %1635 = vmatmul.mubr.f32.gmra.mrb[0].mxu0 %v355
        %v1636 = vpop.f32.mrb[0].mxu0
        %v1637 = vadd.f32 %v1380, %v1636
        %v1638 = vpop.f32.mrb[0].mxu0
        %v1639 = vadd.f32 %v1382, %v1638
        %1640 = vmatprep.mubr.f32.mxu0 %v360
        %1641 = vmatmul.mubr.f32.gmra.mrb[0].mxu0 %v359
        %v1642 = vpop.f32.mrb[0].mxu0
        %v1643 = vadd.f32 %v1386, %v1642
        %v1644 = vpop.f32.mrb[0].mxu0
        %v1645 = vadd.f32 %v1388, %v1644
        %1646 = vmatprep.mubr.f32.mxu0 %v364
        %1647 = vmatmul.mubr.f32.gmra.mrb[0].mxu0 %v363
        %v1648 = vpop.f32.mrb[0].mxu0
        %v1649 = vadd.f32 %v1392, %v1648
        %v1650 = vpop.f32.mrb[0].mxu0
        %v1651 = vadd.f32 %v1394, %v1650
        %1652 = vmatprep.mubr.f32.mxu0 %v368
        %1653 = vmatmul.mubr.f32.gmra.mrb[0].mxu0 %v367
        %v1654 = vpop.f32.mrb[0].mxu0
        %v1655 = vadd.f32 %v1398, %v1654
        %v1656 = vpop.f32.mrb[0].mxu0
        %v1657 = vadd.f32 %v1400, %v1656
        %1658 = vmatprep.mubr.f32.mxu0 %v372
        %1659 = vmatmul.mubr.f32.gmra.mrb[0].mxu0 %v371
        %v1660 = vpop.f32.mrb[0].mxu0
        %v1661 = vadd.f32 %v1404, %v1660
        %v1662 = vpop.f32.mrb[0].mxu0
        %v1663 = vadd.f32 %v1406, %v1662
        %1664 = vmatprep.mubr.f32.mxu0 %v376
        %1665 = vmatmul.mubr.f32.gmra.mrb[0].mxu0 %v375
        %v1666 = vpop.f32.mrb[0].mxu0
        %v1667 = vadd.f32 %v1410, %v1666
        %v1668 = vpop.f32.mrb[0].mxu0
        %v1669 = vadd.f32 %v1412, %v1668
        %1670 = vmatprep.mubr.f32.mxu0 %v380
        %1671 = vmatmul.mubr.f32.gmra.mrb[0].mxu0 %v379
        %v1672 = vpop.f32.mrb[0].mxu0
        %v1673 = vadd.f32 %v1416, %v1672
        %v1674 = vpop.f32.mrb[0].mxu0
        %v1675 = vadd.f32 %v1418, %v1674
        %1676 = vmatprep.mubr.f32.mxu0 %v384
        %1677 = vmatmul.mubr.f32.gmra.mrb[0].mxu0 %v383
        %v1678 = vpop.f32.mrb[0].mxu0
        %v1679 = vadd.f32 %v1422, %v1678
        %v1680 = vpop.f32.mrb[0].mxu0
        %v1681 = vadd.f32 %v1424, %v1680
        %1682 = vmatprep.mubr.f32.mxu0 %v388
        %1683 = vmatmul.mubr.f32.gmra.mrb[0].mxu0 %v387
        %v1684 = vpop.f32.mrb[0].mxu0
        %v1685 = vadd.f32 %v1428, %v1684
        %v1686 = vpop.f32.mrb[0].mxu0
        %v1687 = vadd.f32 %v1430, %v1686
        %1688 = vmatprep.mubr.f32.mxu0 %v392
        %1689 = vmatmul.mubr.f32.gmra.mrb[0].mxu0 %v391
        %v1690 = vpop.f32.mrb[0].mxu0
        %v1691 = vadd.f32 %v1434, %v1690
        %v1692 = vpop.f32.mrb[0].mxu0
        %v1693 = vadd.f32 %v1436, %v1692
        %1694 = vmatprep.mubr.f32.mxu0 %v396
        %1695 = vmatmul.mubr.f32.gmra.mrb[0].mxu0 %v395
        %v1696 = vpop.f32.mrb[0].mxu0
        %v1697 = vadd.f32 %v1440, %v1696
        %v1698 = vpop.f32.mrb[0].mxu0
        %v1699 = vadd.f32 %v1442, %v1698
        %1700 = vmatprep.mubr.f32.mxu0 %v400
        %1701 = vmatmul.mubr.f32.gmra.mrb[0].mxu0 %v399
        %v1702 = vpop.f32.mrb[0].mxu0
        %v1703 = vadd.f32 %v1446, %v1702
        %v1704 = vpop.f32.mrb[0].mxu0
        %v1705 = vadd.f32 %v1448, %v1704
        %1706 = vdwg.mxu0
        %v1707 = vld [vmem:[%s240] sm:$0xff]
        %v1708 = vld [vmem:[%s240 + $0x8] sm:$0xff]
        %v1709 = vld [vmem:[%s240 + $0x10] sm:$0xff]
        %v1710 = vld [vmem:[%s240 + $0x18] sm:$0xff]
        %v1711 = vld [vmem:[%s240 + $0x20] sm:$0xff]
        %v1712 = vld [vmem:[%s240 + $0x28] sm:$0xff]
        %v1713 = vld [vmem:[%s240 + $0x30] sm:$0xff]
        %v1714 = vld [vmem:[%s240 + $0x38] sm:$0xff]
        %v1715 = vld [vmem:[%s240 + $0x40] sm:$0xff]
        %v1716 = vld [vmem:[%s240 + $0x48] sm:$0xff]
        %v1717 = vld [vmem:[%s240 + $0x50] sm:$0xff]
        %v1718 = vld [vmem:[%s240 + $0x58] sm:$0xff]
        %v1719 = vld [vmem:[%s240 + $0x60] sm:$0xff]
        %v1720 = vld [vmem:[%s240 + $0x68] sm:$0xff]
        %v1721 = vld [vmem:[%s240 + $0x70] sm:$0xff]
        %v1722 = vld [vmem:[%s240 + $0x78] sm:$0xff]
        %v1723 = vld [vmem:[%s240 + $0x80] sm:$0xff]
        %v1724 = vld [vmem:[%s240 + $0x88] sm:$0xff]
        %v1725 = vld [vmem:[%s240 + $0x90] sm:$0xff]
        %v1726 = vld [vmem:[%s240 + $0x98] sm:$0xff]
        %v1727 = vld [vmem:[%s240 + $0xa0] sm:$0xff]
        %v1728 = vld [vmem:[%s240 + $0xa8] sm:$0xff]
        %v1729 = vld [vmem:[%s240 + $0xb0] sm:$0xff]
        %v1730 = vld [vmem:[%s240 + $0xb8] sm:$0xff]
        %v1731 = vld [vmem:[%s240 + $0xc0] sm:$0xff]
        %v1732 = vld [vmem:[%s240 + $0xc8] sm:$0xff]
        %v1733 = vld [vmem:[%s240 + $0xd0] sm:$0xff]
        %v1734 = vld [vmem:[%s240 + $0xd8] sm:$0xff]
        %v1735 = vld [vmem:[%s240 + $0xe0] sm:$0xff]
        %v1736 = vld [vmem:[%s240 + $0xe8] sm:$0xff]
        %v1737 = vld [vmem:[%s240 + $0xf0] sm:$0xff]
        %v1738 = vld [vmem:[%s240 + $0xf8] sm:$0xff]
        %v1739 = vld [vmem:[%s240 + $0x100] sm:$0xff]
        %v1740 = vld [vmem:[%s240 + $0x108] sm:$0xff]
        %v1741 = vld [vmem:[%s240 + $0x110] sm:$0xff]
        %v1742 = vld [vmem:[%s240 + $0x118] sm:$0xff]
        %v1743 = vld [vmem:[%s240 + $0x120] sm:$0xff]
        %v1744 = vld [vmem:[%s240 + $0x128] sm:$0xff]
        %v1745 = vld [vmem:[%s240 + $0x130] sm:$0xff]
        %v1746 = vld [vmem:[%s240 + $0x138] sm:$0xff]
        %v1747 = vld [vmem:[%s240 + $0x140] sm:$0xff]
        %v1748 = vld [vmem:[%s240 + $0x148] sm:$0xff]
        %v1749 = vld [vmem:[%s240 + $0x150] sm:$0xff]
        %v1750 = vld [vmem:[%s240 + $0x158] sm:$0xff]
        %v1751 = vld [vmem:[%s240 + $0x160] sm:$0xff]
        %v1752 = vld [vmem:[%s240 + $0x168] sm:$0xff]
        %v1753 = vld [vmem:[%s240 + $0x170] sm:$0xff]
        %v1754 = vld [vmem:[%s240 + $0x178] sm:$0xff]
        %v1755 = vld [vmem:[%s240 + $0x180] sm:$0xff]
        %v1756 = vld [vmem:[%s240 + $0x188] sm:$0xff]
        %v1757 = vld [vmem:[%s240 + $0x190] sm:$0xff]
        %v1758 = vld [vmem:[%s240 + $0x198] sm:$0xff]
        %v1759 = vld [vmem:[%s240 + $0x1a0] sm:$0xff]
        %v1760 = vld [vmem:[%s240 + $0x1a8] sm:$0xff]
        %v1761 = vld [vmem:[%s240 + $0x1b0] sm:$0xff]
        %v1762 = vld [vmem:[%s240 + $0x1b8] sm:$0xff]
        %v1763 = vld [vmem:[%s240 + $0x1c0] sm:$0xff]
        %v1764 = vld [vmem:[%s240 + $0x1c8] sm:$0xff]
        %v1765 = vld [vmem:[%s240 + $0x1d0] sm:$0xff]
        %v1766 = vld [vmem:[%s240 + $0x1d8] sm:$0xff]
        %v1767 = vld [vmem:[%s240 + $0x1e0] sm:$0xff]
        %v1768 = vld [vmem:[%s240 + $0x1e8] sm:$0xff]
        %v1769 = vld [vmem:[%s240 + $0x1f0] sm:$0xff]
        %v1770 = vld [vmem:[%s240 + $0x1f8] sm:$0xff]
        %v1771 = vunpack.c.l.bf16 %v1707
        %v1772 = vunpack.c.h.bf16 %v1707
        %v1773 = vunpack.c.l.bf16 %v1708
        %v1774 = vunpack.c.h.bf16 %v1708
        %v1775 = vunpack.c.l.bf16 %v1709
        %v1776 = vunpack.c.h.bf16 %v1709
        %v1777 = vunpack.c.l.bf16 %v1710
        %v1778 = vunpack.c.h.bf16 %v1710
        %v1779 = vunpack.c.l.bf16 %v1711
        %v1780 = vunpack.c.h.bf16 %v1711
        %v1781 = vunpack.c.l.bf16 %v1712
        %v1782 = vunpack.c.h.bf16 %v1712
        %v1783 = vunpack.c.l.bf16 %v1713
        %v1784 = vunpack.c.h.bf16 %v1713
        %v1785 = vunpack.c.l.bf16 %v1714
        %v1786 = vunpack.c.h.bf16 %v1714
        %v1787 = vunpack.c.l.bf16 %v1715
        %v1788 = vunpack.c.h.bf16 %v1715
        %v1789 = vunpack.c.l.bf16 %v1716
        %v1790 = vunpack.c.h.bf16 %v1716
        %v1791 = vunpack.c.l.bf16 %v1717
        %v1792 = vunpack.c.h.bf16 %v1717
        %v1793 = vunpack.c.l.bf16 %v1718
        %v1794 = vunpack.c.h.bf16 %v1718
        %v1795 = vunpack.c.l.bf16 %v1719
        %v1796 = vunpack.c.h.bf16 %v1719
        %v1797 = vunpack.c.l.bf16 %v1720
        %v1798 = vunpack.c.h.bf16 %v1720
        %v1799 = vunpack.c.l.bf16 %v1721
        %v1800 = vunpack.c.h.bf16 %v1721
        %v1801 = vunpack.c.l.bf16 %v1722
        %v1802 = vunpack.c.h.bf16 %v1722
        %v1803 = vunpack.c.l.bf16 %v1723
        %v1804 = vunpack.c.h.bf16 %v1723
        %v1805 = vunpack.c.l.bf16 %v1724
        %v1806 = vunpack.c.h.bf16 %v1724
        %v1807 = vunpack.c.l.bf16 %v1725
        %v1808 = vunpack.c.h.bf16 %v1725
        %v1809 = vunpack.c.l.bf16 %v1726
        %v1810 = vunpack.c.h.bf16 %v1726
        %v1811 = vunpack.c.l.bf16 %v1727
        %v1812 = vunpack.c.h.bf16 %v1727
        %v1813 = vunpack.c.l.bf16 %v1728
        %v1814 = vunpack.c.h.bf16 %v1728
        %v1815 = vunpack.c.l.bf16 %v1729
        %v1816 = vunpack.c.h.bf16 %v1729
        %v1817 = vunpack.c.l.bf16 %v1730
        %v1818 = vunpack.c.h.bf16 %v1730
        %v1819 = vunpack.c.l.bf16 %v1731
        %v1820 = vunpack.c.h.bf16 %v1731
        %v1821 = vunpack.c.l.bf16 %v1732
        %v1822 = vunpack.c.h.bf16 %v1732
        %v1823 = vunpack.c.l.bf16 %v1733
        %v1824 = vunpack.c.h.bf16 %v1733
        %v1825 = vunpack.c.l.bf16 %v1734
        %v1826 = vunpack.c.h.bf16 %v1734
        %v1827 = vunpack.c.l.bf16 %v1735
        %v1828 = vunpack.c.h.bf16 %v1735
        %v1829 = vunpack.c.l.bf16 %v1736
        %v1830 = vunpack.c.h.bf16 %v1736
        %v1831 = vunpack.c.l.bf16 %v1737
        %v1832 = vunpack.c.h.bf16 %v1737
        %v1833 = vunpack.c.l.bf16 %v1738
        %v1834 = vunpack.c.h.bf16 %v1738
        %v1835 = vunpack.c.l.bf16 %v1739
        %v1836 = vunpack.c.h.bf16 %v1739
        %v1837 = vunpack.c.l.bf16 %v1740
        %v1838 = vunpack.c.h.bf16 %v1740
        %v1839 = vunpack.c.l.bf16 %v1741
        %v1840 = vunpack.c.h.bf16 %v1741
        %v1841 = vunpack.c.l.bf16 %v1742
        %v1842 = vunpack.c.h.bf16 %v1742
        %v1843 = vunpack.c.l.bf16 %v1743
        %v1844 = vunpack.c.h.bf16 %v1743
        %v1845 = vunpack.c.l.bf16 %v1744
        %v1846 = vunpack.c.h.bf16 %v1744
        %v1847 = vunpack.c.l.bf16 %v1745
        %v1848 = vunpack.c.h.bf16 %v1745
        %v1849 = vunpack.c.l.bf16 %v1746
        %v1850 = vunpack.c.h.bf16 %v1746
        %v1851 = vunpack.c.l.bf16 %v1747
        %v1852 = vunpack.c.h.bf16 %v1747
        %v1853 = vunpack.c.l.bf16 %v1748
        %v1854 = vunpack.c.h.bf16 %v1748
        %v1855 = vunpack.c.l.bf16 %v1749
        %v1856 = vunpack.c.h.bf16 %v1749
        %v1857 = vunpack.c.l.bf16 %v1750
        %v1858 = vunpack.c.h.bf16 %v1750
        %v1859 = vunpack.c.l.bf16 %v1751
        %v1860 = vunpack.c.h.bf16 %v1751
        %v1861 = vunpack.c.l.bf16 %v1752
        %v1862 = vunpack.c.h.bf16 %v1752
        %v1863 = vunpack.c.l.bf16 %v1753
        %v1864 = vunpack.c.h.bf16 %v1753
        %v1865 = vunpack.c.l.bf16 %v1754
        %v1866 = vunpack.c.h.bf16 %v1754
        %v1867 = vunpack.c.l.bf16 %v1755
        %v1868 = vunpack.c.h.bf16 %v1755
        %v1869 = vunpack.c.l.bf16 %v1756
        %v1870 = vunpack.c.h.bf16 %v1756
        %v1871 = vunpack.c.l.bf16 %v1757
        %v1872 = vunpack.c.h.bf16 %v1757
        %v1873 = vunpack.c.l.bf16 %v1758
        %v1874 = vunpack.c.h.bf16 %v1758
        %v1875 = vunpack.c.l.bf16 %v1759
        %v1876 = vunpack.c.h.bf16 %v1759
        %v1877 = vunpack.c.l.bf16 %v1760
        %v1878 = vunpack.c.h.bf16 %v1760
        %v1879 = vunpack.c.l.bf16 %v1761
        %v1880 = vunpack.c.h.bf16 %v1761
        %v1881 = vunpack.c.l.bf16 %v1762
        %v1882 = vunpack.c.h.bf16 %v1762
        %v1883 = vunpack.c.l.bf16 %v1763
        %v1884 = vunpack.c.h.bf16 %v1763
        %v1885 = vunpack.c.l.bf16 %v1764
        %v1886 = vunpack.c.h.bf16 %v1764
        %v1887 = vunpack.c.l.bf16 %v1765
        %v1888 = vunpack.c.h.bf16 %v1765
        %v1889 = vunpack.c.l.bf16 %v1766
        %v1890 = vunpack.c.h.bf16 %v1766
        %v1891 = vunpack.c.l.bf16 %v1767
        %v1892 = vunpack.c.h.bf16 %v1767
        %v1893 = vunpack.c.l.bf16 %v1768
        %v1894 = vunpack.c.h.bf16 %v1768
        %v1895 = vunpack.c.l.bf16 %v1769
        %v1896 = vunpack.c.h.bf16 %v1769
        %v1897 = vunpack.c.l.bf16 %v1770
        %v1898 = vunpack.c.h.bf16 %v1770
        %v1899 = vmul.f32 %v1003, %v1771
        %v1900 = vmul.f32 %v1005, %v1772
        %v1901 = vmul.f32 %v1517, %v1773
        %v1902 = vmul.f32 %v1519, %v1774
        %v1903 = vmul.f32 %v1009, %v1775
        %v1904 = vmul.f32 %v1011, %v1776
        %v1905 = vmul.f32 %v1523, %v1777
        %v1906 = vmul.f32 %v1525, %v1778
        %v1907 = vmul.f32 %v1015, %v1779
        %v1908 = vmul.f32 %v1017, %v1780
        %v1909 = vmul.f32 %v1529, %v1781
        %v1910 = vmul.f32 %v1531, %v1782
        %v1911 = vmul.f32 %v1021, %v1783
        %v1912 = vmul.f32 %v1023, %v1784
        %v1913 = vmul.f32 %v1535, %v1785
        %v1914 = vmul.f32 %v1537, %v1786
        %v1915 = vmul.f32 %v1027, %v1787
        %v1916 = vmul.f32 %v1029, %v1788
        %v1917 = vmul.f32 %v1541, %v1789
        %v1918 = vmul.f32 %v1543, %v1790
        %v1919 = vmul.f32 %v1033, %v1791
        %v1920 = vmul.f32 %v1035, %v1792
        %v1921 = vmul.f32 %v1547, %v1793
        %v1922 = vmul.f32 %v1549, %v1794
        %v1923 = vmul.f32 %v1039, %v1795
        %v1924 = vmul.f32 %v1041, %v1796
        %v1925 = vmul.f32 %v1553, %v1797
        %v1926 = vmul.f32 %v1555, %v1798
        %v1927 = vmul.f32 %v1045, %v1799
        %v1928 = vmul.f32 %v1047, %v1800
        %v1929 = vmul.f32 %v1559, %v1801
        %v1930 = vmul.f32 %v1561, %v1802
        %v1931 = vmul.f32 %v1051, %v1803
        %v1932 = vmul.f32 %v1053, %v1804
        %v1933 = vmul.f32 %v1565, %v1805
        %v1934 = vmul.f32 %v1567, %v1806
        %v1935 = vmul.f32 %v1057, %v1807
        %v1936 = vmul.f32 %v1059, %v1808
        %v1937 = vmul.f32 %v1571, %v1809
        %v1938 = vmul.f32 %v1573, %v1810
        %v1939 = vmul.f32 %v1063, %v1811
        %v1940 = vmul.f32 %v1065, %v1812
        %v1941 = vmul.f32 %v1577, %v1813
        %v1942 = vmul.f32 %v1579, %v1814
        %v1943 = vmul.f32 %v1069, %v1815
        %v1944 = vmul.f32 %v1071, %v1816
        %v1945 = vmul.f32 %v1583, %v1817
        %v1946 = vmul.f32 %v1585, %v1818
        %v1947 = vmul.f32 %v1075, %v1819
        %v1948 = vmul.f32 %v1077, %v1820
        %v1949 = vmul.f32 %v1589, %v1821
        %v1950 = vmul.f32 %v1591, %v1822
        %v1951 = vmul.f32 %v1081, %v1823
        %v1952 = vmul.f32 %v1083, %v1824
        %v1953 = vmul.f32 %v1595, %v1825
        %v1954 = vmul.f32 %v1597, %v1826
        %v1955 = vmul.f32 %v1087, %v1827
        %v1956 = vmul.f32 %v1089, %v1828
        %v1957 = vmul.f32 %v1601, %v1829
        %v1958 = vmul.f32 %v1603, %v1830
        %v1959 = vmul.f32 %v1093, %v1831
        %v1960 = vmul.f32 %v1095, %v1832
        %v1961 = vmul.f32 %v1607, %v1833
        %v1962 = vmul.f32 %v1609, %v1834
        %v1963 = vmul.f32 %v1099, %v1835
        %v1964 = vmul.f32 %v1101, %v1836
        %v1965 = vmul.f32 %v1613, %v1837
        %v1966 = vmul.f32 %v1615, %v1838
        %v1967 = vmul.f32 %v1105, %v1839
        %v1968 = vmul.f32 %v1107, %v1840
        %v1969 = vmul.f32 %v1619, %v1841
        %v1970 = vmul.f32 %v1621, %v1842
        %v1971 = vmul.f32 %v1111, %v1843
        %v1972 = vmul.f32 %v1113, %v1844
        %v1973 = vmul.f32 %v1625, %v1845
        %v1974 = vmul.f32 %v1627, %v1846
        %v1975 = vmul.f32 %v1117, %v1847
        %v1976 = vmul.f32 %v1119, %v1848
        %v1977 = vmul.f32 %v1631, %v1849
        %v1978 = vmul.f32 %v1633, %v1850
        %v1979 = vmul.f32 %v1123, %v1851
        %v1980 = vmul.f32 %v1125, %v1852
        %v1981 = vmul.f32 %v1637, %v1853
        %v1982 = vmul.f32 %v1639, %v1854
        %v1983 = vmul.f32 %v1129, %v1855
        %v1984 = vmul.f32 %v1131, %v1856
        %v1985 = vmul.f32 %v1643, %v1857
        %v1986 = vmul.f32 %v1645, %v1858
        %v1987 = vmul.f32 %v1135, %v1859
        %v1988 = vmul.f32 %v1137, %v1860
        %v1989 = vmul.f32 %v1649, %v1861
        %v1990 = vmul.f32 %v1651, %v1862
        %v1991 = vmul.f32 %v1141, %v1863
        %v1992 = vmul.f32 %v1143, %v1864
        %v1993 = vmul.f32 %v1655, %v1865
        %v1994 = vmul.f32 %v1657, %v1866
        %v1995 = vmul.f32 %v1147, %v1867
        %v1996 = vmul.f32 %v1149, %v1868
        %v1997 = vmul.f32 %v1661, %v1869
        %v1998 = vmul.f32 %v1663, %v1870
        %v1999 = vmul.f32 %v1153, %v1871
        %v2000 = vmul.f32 %v1155, %v1872
        %v2001 = vmul.f32 %v1667, %v1873
        %v2002 = vmul.f32 %v1669, %v1874
        %v2003 = vmul.f32 %v1159, %v1875
        %v2004 = vmul.f32 %v1161, %v1876
        %v2005 = vmul.f32 %v1673, %v1877
        %v2006 = vmul.f32 %v1675, %v1878
        %v2007 = vmul.f32 %v1165, %v1879
        %v2008 = vmul.f32 %v1167, %v1880
        %v2009 = vmul.f32 %v1679, %v1881
        %v2010 = vmul.f32 %v1681, %v1882
        %v2011 = vmul.f32 %v1171, %v1883
        %v2012 = vmul.f32 %v1173, %v1884
        %v2013 = vmul.f32 %v1685, %v1885
        %v2014 = vmul.f32 %v1687, %v1886
        %v2015 = vmul.f32 %v1177, %v1887
        %v2016 = vmul.f32 %v1179, %v1888
        %v2017 = vmul.f32 %v1691, %v1889
        %v2018 = vmul.f32 %v1693, %v1890
        %v2019 = vmul.f32 %v1183, %v1891
        %v2020 = vmul.f32 %v1185, %v1892
        %v2021 = vmul.f32 %v1697, %v1893
        %v2022 = vmul.f32 %v1699, %v1894
        %v2023 = vmul.f32 %v1189, %v1895
        %v2024 = vmul.f32 %v1191, %v1896
        %v2025 = vmul.f32 %v1703, %v1897
        %v2026 = vmul.f32 %v1705, %v1898
        %v2027 = vadd.f32 %v273, %v1899
        %v2028 = vadd.f32 %v274, %v1900
        %v2029 = vadd.f32 %v275, %v1901
        %v2030 = vadd.f32 %v276, %v1902
        %v2031 = vadd.f32 %v277, %v1903
        %v2032 = vadd.f32 %v278, %v1904
        %v2033 = vadd.f32 %v279, %v1905
        %v2034 = vadd.f32 %v280, %v1906
        %v2035 = vadd.f32 %v281, %v1907
        %v2036 = vadd.f32 %v282, %v1908
        %v2037 = vadd.f32 %v283, %v1909
        %v2038 = vadd.f32 %v284, %v1910
        %v2039 = vadd.f32 %v285, %v1911
        %v2040 = vadd.f32 %v286, %v1912
        %v2041 = vadd.f32 %v287, %v1913
        %v2042 = vadd.f32 %v288, %v1914
        %v2043 = vadd.f32 %v289, %v1915
        %v2044 = vadd.f32 %v290, %v1916
        %v2045 = vadd.f32 %v291, %v1917
        %v2046 = vadd.f32 %v292, %v1918
        %v2047 = vadd.f32 %v293, %v1919
        %v2048 = vadd.f32 %v294, %v1920
        %v2049 = vadd.f32 %v295, %v1921
        %v2050 = vadd.f32 %v296, %v1922
        %v2051 = vadd.f32 %v297, %v1923
        %v2052 = vadd.f32 %v298, %v1924
        %v2053 = vadd.f32 %v299, %v1925
        %v2054 = vadd.f32 %v300, %v1926
        %v2055 = vadd.f32 %v301, %v1927
        %v2056 = vadd.f32 %v302, %v1928
        %v2057 = vadd.f32 %v303, %v1929
        %v2058 = vadd.f32 %v304, %v1930
        %v2059 = vadd.f32 %v305, %v1931
        %v2060 = vadd.f32 %v306, %v1932
        %v2061 = vadd.f32 %v307, %v1933
        %v2062 = vadd.f32 %v308, %v1934
        %v2063 = vadd.f32 %v309, %v1935
        %v2064 = vadd.f32 %v310, %v1936
        %v2065 = vadd.f32 %v311, %v1937
        %v2066 = vadd.f32 %v312, %v1938
        %v2067 = vadd.f32 %v313, %v1939
        %v2068 = vadd.f32 %v314, %v1940
        %v2069 = vadd.f32 %v315, %v1941
        %v2070 = vadd.f32 %v316, %v1942
        %v2071 = vadd.f32 %v317, %v1943
        %v2072 = vadd.f32 %v318, %v1944
        %v2073 = vadd.f32 %v319, %v1945
        %v2074 = vadd.f32 %v320, %v1946
        %v2075 = vadd.f32 %v321, %v1947
        %v2076 = vadd.f32 %v322, %v1948
        %v2077 = vadd.f32 %v323, %v1949
        %v2078 = vadd.f32 %v324, %v1950
        %v2079 = vadd.f32 %v325, %v1951
        %v2080 = vadd.f32 %v326, %v1952
        %v2081 = vadd.f32 %v327, %v1953
        %v2082 = vadd.f32 %v328, %v1954
        %v2083 = vadd.f32 %v329, %v1955
        %v2084 = vadd.f32 %v330, %v1956
        %v2085 = vadd.f32 %v331, %v1957
        %v2086 = vadd.f32 %v332, %v1958
        %v2087 = vadd.f32 %v333, %v1959
        %v2088 = vadd.f32 %v334, %v1960
        %v2089 = vadd.f32 %v335, %v1961
        %v2090 = vadd.f32 %v336, %v1962
        %v2091 = vadd.f32 %v337, %v1963
        %v2092 = vadd.f32 %v338, %v1964
        %v2093 = vadd.f32 %v339, %v1965
        %v2094 = vadd.f32 %v340, %v1966
        %v2095 = vadd.f32 %v341, %v1967
        %v2096 = vadd.f32 %v342, %v1968
        %v2097 = vadd.f32 %v343, %v1969
        %v2098 = vadd.f32 %v344, %v1970
        %v2099 = vadd.f32 %v345, %v1971
        %v2100 = vadd.f32 %v346, %v1972
        %v2101 = vadd.f32 %v347, %v1973
        %v2102 = vadd.f32 %v348, %v1974
        %v2103 = vadd.f32 %v349, %v1975
        %v2104 = vadd.f32 %v350, %v1976
        %v2105 = vadd.f32 %v351, %v1977
        %v2106 = vadd.f32 %v352, %v1978
        %v2107 = vadd.f32 %v353, %v1979
        %v2108 = vadd.f32 %v354, %v1980
        %v2109 = vadd.f32 %v355, %v1981
        %v2110 = vadd.f32 %v356, %v1982
        %v2111 = vadd.f32 %v357, %v1983
        %v2112 = vadd.f32 %v358, %v1984
        %v2113 = vadd.f32 %v359, %v1985
        %v2114 = vadd.f32 %v360, %v1986
        %v2115 = vadd.f32 %v361, %v1987
        %v2116 = vadd.f32 %v362, %v1988
        %v2117 = vadd.f32 %v363, %v1989
        %v2118 = vadd.f32 %v364, %v1990
        %v2119 = vadd.f32 %v365, %v1991
        %v2120 = vadd.f32 %v366, %v1992
        %v2121 = vadd.f32 %v367, %v1993
        %v2122 = vadd.f32 %v368, %v1994
        %v2123 = vadd.f32 %v369, %v1995
        %v2124 = vadd.f32 %v370, %v1996
        %v2125 = vadd.f32 %v371, %v1997
        %v2126 = vadd.f32 %v372, %v1998
        %v2127 = vadd.f32 %v373, %v1999
        %v2128 = vadd.f32 %v374, %v2000
        %v2129 = vadd.f32 %v375, %v2001
        %v2130 = vadd.f32 %v376, %v2002
        %v2131 = vadd.f32 %v377, %v2003
        %v2132 = vadd.f32 %v378, %v2004
        %v2133 = vadd.f32 %v379, %v2005
        %v2134 = vadd.f32 %v380, %v2006
        %v2135 = vadd.f32 %v381, %v2007
        %v2136 = vadd.f32 %v382, %v2008
        %v2137 = vadd.f32 %v383, %v2009
        %v2138 = vadd.f32 %v384, %v2010
        %v2139 = vadd.f32 %v385, %v2011
        %v2140 = vadd.f32 %v386, %v2012
        %v2141 = vadd.f32 %v387, %v2013
        %v2142 = vadd.f32 %v388, %v2014
        %v2143 = vadd.f32 %v389, %v2015
        %v2144 = vadd.f32 %v390, %v2016
        %v2145 = vadd.f32 %v391, %v2017
        %v2146 = vadd.f32 %v392, %v2018
        %v2147 = vadd.f32 %v393, %v2019
        %v2148 = vadd.f32 %v394, %v2020
        %v2149 = vadd.f32 %v395, %v2021
        %v2150 = vadd.f32 %v396, %v2022
        %v2151 = vadd.f32 %v397, %v2023
        %v2152 = vadd.f32 %v398, %v2024
        %v2153 = vadd.f32 %v399, %v2025
        %v2154 = vadd.f32 %v400, %v2026
        %2155 = vst [vmem:[%s269] sm:$0xff] %v2027
        %2156 = vst [vmem:[%s269 + $0x8] sm:$0xff] %v2028
        %2157 = vst [vmem:[%s269 + $0x10] sm:$0xff] %v2029
        %2158 = vst [vmem:[%s269 + $0x18] sm:$0xff] %v2030
        %2159 = vst [vmem:[%s269 + $0x20] sm:$0xff] %v2031
        %2160 = vst [vmem:[%s269 + $0x28] sm:$0xff] %v2032
        %2161 = vst [vmem:[%s269 + $0x30] sm:$0xff] %v2033
        %2162 = vst [vmem:[%s269 + $0x38] sm:$0xff] %v2034
        %2163 = vst [vmem:[%s269 + $0x40] sm:$0xff] %v2035
        %2164 = vst [vmem:[%s269 + $0x48] sm:$0xff] %v2036
        %2165 = vst [vmem:[%s269 + $0x50] sm:$0xff] %v2037
        %2166 = vst [vmem:[%s269 + $0x58] sm:$0xff] %v2038
        %2167 = vst [vmem:[%s269 + $0x60] sm:$0xff] %v2039
        %2168 = vst [vmem:[%s269 + $0x68] sm:$0xff] %v2040
        %2169 = vst [vmem:[%s269 + $0x70] sm:$0xff] %v2041
        %2170 = vst [vmem:[%s269 + $0x78] sm:$0xff] %v2042
        %2171 = vst [vmem:[%s269 + $0x80] sm:$0xff] %v2043
        %2172 = vst [vmem:[%s269 + $0x88] sm:$0xff] %v2044
        %2173 = vst [vmem:[%s269 + $0x90] sm:$0xff] %v2045
        %2174 = vst [vmem:[%s269 + $0x98] sm:$0xff] %v2046
        %2175 = vst [vmem:[%s269 + $0xa0] sm:$0xff] %v2047
        %2176 = vst [vmem:[%s269 + $0xa8] sm:$0xff] %v2048
        %2177 = vst [vmem:[%s269 + $0xb0] sm:$0xff] %v2049
        %2178 = vst [vmem:[%s269 + $0xb8] sm:$0xff] %v2050
        %2179 = vst [vmem:[%s269 + $0xc0] sm:$0xff] %v2051
        %2180 = vst [vmem:[%s269 + $0xc8] sm:$0xff] %v2052
        %2181 = vst [vmem:[%s269 + $0xd0] sm:$0xff] %v2053
        %2182 = vst [vmem:[%s269 + $0xd8] sm:$0xff] %v2054
        %2183 = vst [vmem:[%s269 + $0xe0] sm:$0xff] %v2055
        %2184 = vst [vmem:[%s269 + $0xe8] sm:$0xff] %v2056
        %2185 = vst [vmem:[%s269 + $0xf0] sm:$0xff] %v2057
        %2186 = vst [vmem:[%s269 + $0xf8] sm:$0xff] %v2058
        %2187 = vst [vmem:[%s269 + $0x100] sm:$0xff] %v2059
        %2188 = vst [vmem:[%s269 + $0x108] sm:$0xff] %v2060
        %2189 = vst [vmem:[%s269 + $0x110] sm:$0xff] %v2061
        %2190 = vst [vmem:[%s269 + $0x118] sm:$0xff] %v2062
        %2191 = vst [vmem:[%s269 + $0x120] sm:$0xff] %v2063
        %2192 = vst [vmem:[%s269 + $0x128] sm:$0xff] %v2064
        %2193 = vst [vmem:[%s269 + $0x130] sm:$0xff] %v2065
        %2194 = vst [vmem:[%s269 + $0x138] sm:$0xff] %v2066
        %2195 = vst [vmem:[%s269 + $0x140] sm:$0xff] %v2067
        %2196 = vst [vmem:[%s269 + $0x148] sm:$0xff] %v2068
        %2197 = vst [vmem:[%s269 + $0x150] sm:$0xff] %v2069
        %2198 = vst [vmem:[%s269 + $0x158] sm:$0xff] %v2070
        %2199 = vst [vmem:[%s269 + $0x160] sm:$0xff] %v2071
        %2200 = vst [vmem:[%s269 + $0x168] sm:$0xff] %v2072
        %2201 = vst [vmem:[%s269 + $0x170] sm:$0xff] %v2073
        %2202 = vst [vmem:[%s269 + $0x178] sm:$0xff] %v2074
        %2203 = vst [vmem:[%s269 + $0x180] sm:$0xff] %v2075
        %2204 = vst [vmem:[%s269 + $0x188] sm:$0xff] %v2076
        %2205 = vst [vmem:[%s269 + $0x190] sm:$0xff] %v2077
        %2206 = vst [vmem:[%s269 + $0x198] sm:$0xff] %v2078
        %2207 = vst [vmem:[%s269 + $0x1a0] sm:$0xff] %v2079
        %2208 = vst [vmem:[%s269 + $0x1a8] sm:$0xff] %v2080
        %2209 = vst [vmem:[%s269 + $0x1b0] sm:$0xff] %v2081
        %2210 = vst [vmem:[%s269 + $0x1b8] sm:$0xff] %v2082
        %2211 = vst [vmem:[%s269 + $0x1c0] sm:$0xff] %v2083
        %2212 = vst [vmem:[%s269 + $0x1c8] sm:$0xff] %v2084
        %2213 = vst [vmem:[%s269 + $0x1d0] sm:$0xff] %v2085
        %2214 = vst [vmem:[%s269 + $0x1d8] sm:$0xff] %v2086
        %2215 = vst [vmem:[%s269 + $0x1e0] sm:$0xff] %v2087
        %2216 = vst [vmem:[%s269 + $0x1e8] sm:$0xff] %v2088
        %2217 = vst [vmem:[%s269 + $0x1f0] sm:$0xff] %v2089
        %2218 = vst [vmem:[%s269 + $0x1f8] sm:$0xff] %v2090
        %2219 = vst [vmem:[%s269 + $0x200] sm:$0xff] %v2091
        %2220 = vst [vmem:[%s269 + $0x208] sm:$0xff] %v2092
        %2221 = vst [vmem:[%s269 + $0x210] sm:$0xff] %v2093
        %2222 = vst [vmem:[%s269 + $0x218] sm:$0xff] %v2094
        %2223 = vst [vmem:[%s269 + $0x220] sm:$0xff] %v2095
        %2224 = vst [vmem:[%s269 + $0x228] sm:$0xff] %v2096
        %2225 = vst [vmem:[%s269 + $0x230] sm:$0xff] %v2097
        %2226 = vst [vmem:[%s269 + $0x238] sm:$0xff] %v2098
        %2227 = vst [vmem:[%s269 + $0x240] sm:$0xff] %v2099
        %2228 = vst [vmem:[%s269 + $0x248] sm:$0xff] %v2100
        %2229 = vst [vmem:[%s269 + $0x250] sm:$0xff] %v2101
        %2230 = vst [vmem:[%s269 + $0x258] sm:$0xff] %v2102
        %2231 = vst [vmem:[%s269 + $0x260] sm:$0xff] %v2103
        %2232 = vst [vmem:[%s269 + $0x268] sm:$0xff] %v2104
        %2233 = vst [vmem:[%s269 + $0x270] sm:$0xff] %v2105
        %2234 = vst [vmem:[%s269 + $0x278] sm:$0xff] %v2106
        %2235 = vst [vmem:[%s269 + $0x280] sm:$0xff] %v2107
        %2236 = vst [vmem:[%s269 + $0x288] sm:$0xff] %v2108
        %2237 = vst [vmem:[%s269 + $0x290] sm:$0xff] %v2109
        %2238 = vst [vmem:[%s269 + $0x298] sm:$0xff] %v2110
        %2239 = vst [vmem:[%s269 + $0x2a0] sm:$0xff] %v2111
        %2240 = vst [vmem:[%s269 + $0x2a8] sm:$0xff] %v2112
        %2241 = vst [vmem:[%s269 + $0x2b0] sm:$0xff] %v2113
        %2242 = vst [vmem:[%s269 + $0x2b8] sm:$0xff] %v2114
        %2243 = vst [vmem:[%s269 + $0x2c0] sm:$0xff] %v2115
        %2244 = vst [vmem:[%s269 + $0x2c8] sm:$0xff] %v2116
        %2245 = vst [vmem:[%s269 + $0x2d0] sm:$0xff] %v2117
        %2246 = vst [vmem:[%s269 + $0x2d8] sm:$0xff] %v2118
        %2247 = vst [vmem:[%s269 + $0x2e0] sm:$0xff] %v2119
        %2248 = vst [vmem:[%s269 + $0x2e8] sm:$0xff] %v2120
        %2249 = vst [vmem:[%s269 + $0x2f0] sm:$0xff] %v2121
        %2250 = vst [vmem:[%s269 + $0x2f8] sm:$0xff] %v2122
        %2251 = vst [vmem:[%s269 + $0x300] sm:$0xff] %v2123
        %2252 = vst [vmem:[%s269 + $0x308] sm:$0xff] %v2124
        %2253 = vst [vmem:[%s269 + $0x310] sm:$0xff] %v2125
        %2254 = vst [vmem:[%s269 + $0x318] sm:$0xff] %v2126
        %2255 = vst [vmem:[%s269 + $0x320] sm:$0xff] %v2127
        %2256 = vst [vmem:[%s269 + $0x328] sm:$0xff] %v2128
        %2257 = vst [vmem:[%s269 + $0x330] sm:$0xff] %v2129
        %2258 = vst [vmem:[%s269 + $0x338] sm:$0xff] %v2130
        %2259 = vst [vmem:[%s269 + $0x340] sm:$0xff] %v2131
        %2260 = vst [vmem:[%s269 + $0x348] sm:$0xff] %v2132
        %2261 = vst [vmem:[%s269 + $0x350] sm:$0xff] %v2133
        %2262 = vst [vmem:[%s269 + $0x358] sm:$0xff] %v2134
        %2263 = vst [vmem:[%s269 + $0x360] sm:$0xff] %v2135
        %2264 = vst [vmem:[%s269 + $0x368] sm:$0xff] %v2136
        %2265 = vst [vmem:[%s269 + $0x370] sm:$0xff] %v2137
        %2266 = vst [vmem:[%s269 + $0x378] sm:$0xff] %v2138
        %2267 = vst [vmem:[%s269 + $0x380] sm:$0xff] %v2139
        %2268 = vst [vmem:[%s269 + $0x388] sm:$0xff] %v2140
        %2269 = vst [vmem:[%s269 + $0x390] sm:$0xff] %v2141
        %2270 = vst [vmem:[%s269 + $0x398] sm:$0xff] %v2142
        %2271 = vst [vmem:[%s269 + $0x3a0] sm:$0xff] %v2143
        %2272 = vst [vmem:[%s269 + $0x3a8] sm:$0xff] %v2144
        %2273 = vst [vmem:[%s269 + $0x3b0] sm:$0xff] %v2145
        %2274 = vst [vmem:[%s269 + $0x3b8] sm:$0xff] %v2146
        %2275 = vst [vmem:[%s269 + $0x3c0] sm:$0xff] %v2147
        %2276 = vst [vmem:[%s269 + $0x3c8] sm:$0xff] %v2148
        %2277 = vst [vmem:[%s269 + $0x3d0] sm:$0xff] %v2149
        %2278 = vst [vmem:[%s269 + $0x3d8] sm:$0xff] %v2150
        %2279 = vst [vmem:[%s269 + $0x3e0] sm:$0xff] %v2151
        %2280 = vst [vmem:[%s269 + $0x3e8] sm:$0xff] %v2152
        %2281 = vst [vmem:[%s269 + $0x3f0] sm:$0xff] %v2153
        %2282 = vst [vmem:[%s269 + $0x3f8] sm:$0xff] %v2154
        %s2283 = sand.u32 %s124, 1
        %s2284 = scalar_lea.sflag [#allocation4], %s2283
        %s2285 = sand.u32 %s124, 1
        %s2286 = smul.addr %s2285, 1024
        %s2287 = scalar_lea.vmem [#allocation8], %s2286
        // Predicated region
        $region49: #{tpu_custom_call.1} parent=35 // pred_check
          %p2288 = pneg %p134
        $region50: #{tpu_custom_call.1} parent=35 // pred_check_branch
          %2290 = sbr.rel (%p2288) target = $region52
        $region51: #{tpu_custom_call.1} parent=35 // pred_region
          %s2291 = smul.u32 32, %s22
          %s2293 = ssub.s32 16384, 16384
          %2294 = vsyncadd %s2284, %s2293
          %s2295 = smul.addr %s2291, 4
          %s2296 = smul.addr %s2295, 128
          %s2297 = scalar_lea.hbm %s4, %s2296
          %s2298 = sshll.u32 %s2287, 4
          %s2299 = int_to_ptr.vmem [resolvable:$true] %s2298
          %2304 = dma.vmem_to_hbm [thread:$0]  %s2299, 16384, %s2297, %s2284, 512, 512, 32
        $region52: #{tpu_custom_call.1} parent=35 // pred_fallthru
          _
      $region36: #{tpu_custom_call.1} parent=5 // pred_fallthru
        _
      %p2305 = scmp.le.s32.totalorder 2, %s17
      // Predicated region
      $region53: #{tpu_custom_call.1} parent=5 // pred_check
        %p2306 = pneg %p2305
      $region54: #{tpu_custom_call.1} parent=5 // pred_check_branch
        %2308 = sbr.rel (%p2306) target = $region56
      $region55: #{tpu_custom_call.1} parent=5 // pred_region
        %s2309 = ssub.s32 %s17, 2
        // Predicated region
        $region57: #{tpu_custom_call.1} parent=55 // pred_check
          %p2310 = pneg %p140
        $region58: #{tpu_custom_call.1} parent=55 // pred_check_branch
          %2312 = sbr.rel (%p2310) target = $region60
        $region59: #{tpu_custom_call.1} parent=55 // pred_region
          %s2313 = sand.u32 %s125, 1
          %s2314 = scalar_lea.sflag [#allocation4], %s2313
          %s2315 = sand.u32 %s125, 1
          %s2316 = smul.addr %s2315, 1024
          %s2317 = scalar_lea.vmem [#allocation8], %s2316
          %2318 = dma.done %s2314, 16384
        $region60: #{tpu_custom_call.1} parent=55 // pred_fallthru
          _
      $region56: #{tpu_custom_call.1} parent=5 // pred_fallthru
        _
    $region6: #{tpu_custom_call.1} parent=1 // loop_footer
      %s21 = sadd.s32 1, %s17
    $region7: #{tpu_custom_call.1} parent=1 // loop_footer_branch
      %16 = sbr.rel target = $region3
    $region8: #{tpu_custom_call.1} parent=1 // loop_exit
      _
    %2319 = vsyncpa [#allocation3], 1
    %s2320 = scalar_lea.sflag [#allocation3], 1
    %2321 = vsyncpa %s2320, 1
    %2322 = vsyncpa [#allocation6], 1
    %2323 = vsyncpa [#allocation4], 1
    %s2324 = scalar_lea.sflag [#allocation4], 1
    %2325 = vsyncpa %s2324, 1

</llo_original>
